<compile_context>
chip_gen: v5e
topology: v5e:2x2
jax: 0.10.0
libtpu: 0.0.40
codegen_flags: <defaults>
</compile_context>

<pallas_src>
import functools

import jax
import jax.numpy as jnp
from jax import lax
from jax.experimental import pallas as pl
from jax.experimental.pallas import tpu as pltpu

K_TAPS = 5   # Conv1d kernel size
KP = 8       # conv-1 taps zero-padded to 8 for a clean K dimension
PAD = 2      # Conv1d padding ("same" for k=5)
C1 = 96      # conv block 1 output channels
C2 = 54      # conv block 2 output channels
H1 = 512     # classifier hidden 1
H2 = 128     # classifier hidden 2


def _round_up(x, m):
    return (x + m - 1) // m * m


def _model2_kernel(TB, L, L2, L4,
                   x1_ref, w1_ref, s1_ref, t1_ref,
                   w2_ref, s2_ref, t2_ref,
                   wf1_ref, bf1_ref, wf2_ref, bf2_ref, wf3_ref, bf3_ref,
                   out_ref,
                   act1_s, p1_s, act2_s):
    """One grid step == one batch tile of TB samples (all activations are 2D slabs).

    x1_ref : (TB*L, KP)  conv-1 im2col rows (row = b*L + l, col = tap), f32
    w1_ref : (KP, C1) f32          w2_ref : (K_TAPS, C1, C2) bf16
    wf1_ref: (L4, C2, H1) bf16     wf2_ref: (H1, H2) bf16    wf3_ref: (H2, NCP) bf16
    s*/t*  : (1, C) folded BN(eval)+conv-bias scale / shift, f32
    out_ref: (TB, NCP)  softmax probabilities (padded class lanes -> 0)
    scratch: act1_s (TB*L, C1), p1_s (TB*L2 + 2*PAD, C1), act2_s (TB*L2, C2)
    """
    f32 = jnp.float32
    bf16 = jnp.bfloat16
    TBL = TB * L
    TBL2 = TB * L2

    # ---- conv block 1: Conv1d(1->96, k=5, p=2) + BN(eval) + ReLU, one matmul (M=TB*L) ----
    a1 = jnp.dot(x1_ref[...], w1_ref[...], preferred_element_type=f32)       # (TBL, C1)
    act1_s[...] = jnp.maximum(a1 * s1_ref[...] + t1_ref[...], 0.0)

    # ---- MaxPool1d(2,2): one vectorized max over stride-2 sublane reads ----
    pooled1 = jnp.maximum(act1_s[pl.ds(0, TBL2, stride=2), :],
                          act1_s[pl.ds(1, TBL2, stride=2), :])               # (TBL2, C1)
    zrow = jnp.zeros((PAD, C1), f32)
    p1_s[0:PAD, :] = zrow
    p1_s[PAD + TBL2:PAD + TBL2 + PAD, :] = zrow
    p1_s[PAD:PAD + TBL2, :] = pooled1

    # ---- conv block 2: Conv1d(96->54, k=5, p=2) + BN(eval) + ReLU ----
    # 5 accumulating (TB*L2, C1)@(C1, C2) matmuls on shifted flat views; rows whose
    # shift crosses a sample boundary are masked to emulate per-sample zero padding.
    j_idx = lax.broadcasted_iota(jnp.int32, (TBL2, 1), 0) % L2
    acc2 = jnp.zeros((TBL2, C2), f32)
    for k in range(K_TAPS):
        valid = jnp.logical_and(j_idx >= PAD - k, j_idx < L2 + PAD - k)
        xk = jnp.where(valid, p1_s[k:k + TBL2, :], 0.0).astype(bf16)
        acc2 = acc2 + jnp.dot(xk, w2_ref[k], preferred_element_type=f32)
    act2_s[...] = jnp.maximum(acc2 * s2_ref[...] + t2_ref[...], 0.0)

    # ---- MaxPool1d(2,2) fused with Linear(54*L4 -> 512): L4 matmuls with M = TB ----
    # TODO(synk): for large input_dimension collapse this into a single
    #             (TB, L4*C2) @ (L4*C2, H1) matmul (needs a lane-merge relayout).
    h1 = jnp.zeros((TB, H1), f32)
    for l in range(L4):
        pooled = jnp.maximum(act2_s[pl.ds(2 * l, TB, stride=L2), :],
                             act2_s[pl.ds(2 * l + 1, TB, stride=L2), :])     # (TB, C2)
        h1 = h1 + jnp.dot(pooled.astype(bf16), wf1_ref[l],
                          preferred_element_type=f32)
    h1 = jnp.maximum(h1 + bf1_ref[...], 0.0)

    # ---- Linear(512 -> 128) + ReLU, Linear(128 -> n_cls padded to NCP) ----
    h2 = jnp.maximum(jnp.dot(h1.astype(bf16), wf2_ref[...],
                             preferred_element_type=f32) + bf2_ref[...], 0.0)
    logits = jnp.dot(h2.astype(bf16), wf3_ref[...],
                     preferred_element_type=f32) + bf3_ref[...]              # (TB, NCP)

    # ---- softmax over classes (padded class lanes carry -1e30 bias -> exact 0 prob) ----
    m = jnp.max(logits, axis=-1, keepdims=True)
    e = jnp.exp(logits - m)
    s = jnp.sum(e, axis=-1, keepdims=True)
    # pl.reciprocal(approx=True) is available for the EUP slot; exact kept so the
    # probabilities sum to 1 to float precision.
    out_ref[...] = e * pl.reciprocal(s, approx=False)


def model2_forward(x, y, params, infer=False):
    """Mirrors Model2.forward(x, y, infer) with uses_attention=False (y, infer unused)."""
    del y, infer
    B, cin, L = x.shape
    assert cin == 1 and L % 4 == 0 and (L // 4) > 0
    L2, L4 = L // 2, L // 4
    n_cls = params["fc3_w"].shape[0]
    NCP = _round_up(n_cls, 128)          # lane-dense output slab
    eps = 1e-5
    f32, bf16 = jnp.float32, jnp.bfloat16

    # ---------- parameter plumbing (wrapper-side layout only) ----------
    def fold_bn(bias, gamma, beta, mean, var):
        s = gamma / jnp.sqrt(var + eps)
        t = (bias - mean) * s + beta
        return s[None, :].astype(f32), t[None, :].astype(f32)

    s1, t1 = fold_bn(params["b1"], params["g1"], params["be1"], params["m1"], params["v1"])
    s2, t2 = fold_bn(params["b2"], params["g2"], params["be2"], params["m2"], params["v2"])

    w1col = jnp.zeros((KP, C1), f32).at[:K_TAPS].set(
        jnp.transpose(params["w1"][:, 0, :], (1, 0)).astype(f32))            # (KP, C1)
    w2t = jnp.transpose(params["w2"], (2, 1, 0)).astype(bf16)                # (5, C1, C2)

    # PyTorch flattens z (B, C2, L4) channel-major: flat[c*L4 + l] = z[c, l].
    wf1 = jnp.transpose(params["fc1_w"].reshape(H1, C2, L4), (2, 1, 0)).astype(bf16)
    bf1 = params["fc1_b"][None, :].astype(f32)
    wf2 = jnp.transpose(params["fc2_w"], (1, 0)).astype(bf16)                # (H1, H2)
    bf2 = params["fc2_b"][None, :].astype(f32)
    wf3 = jnp.zeros((H2, NCP), bf16).at[:, :n_cls].set(
        jnp.transpose(params["fc3_w"], (1, 0)).astype(bf16))                 # (H2, NCP)
    bf3 = jnp.full((1, NCP), -1e30, f32).at[0, :n_cls].set(params["fc3_b"].astype(f32))

    # ---------- batch tiling ----------
    TB = min(128, _round_up(B, 8))       # batch tile per grid step (multiple of 8)
    B_pad = _round_up(B, TB)

    # conv-1 im2col (pure layout plumbing): X1[b*L + l, k] = zero-padded x[b, l + k - PAD]
    xs = jnp.pad(x[:, 0, :].astype(f32), ((0, B_pad - B), (PAD, PAD)))       # (B_pad, L+4)
    X1 = jnp.stack([xs[:, k:k + L] for k in range(K_TAPS)], axis=-1)         # (B_pad, L, 5)
    X1 = jnp.pad(X1, ((0, 0), (0, 0), (0, KP - K_TAPS))).reshape(B_pad * L, KP)

    # ---------- Pallas call ----------
    kernel = functools.partial(_model2_kernel, TB, L, L2, L4)

    def _full(a):
        nd = a.ndim
        return pl.BlockSpec(a.shape, lambda i, _n=nd: (0,) * _n)

    in_specs = [pl.BlockSpec((TB * L, KP), lambda i: (i, 0))] + [
        _full(a) for a in (w1col, s1, t1, w2t, s2, t2, wf1, bf1, wf2, bf2, wf3, bf3)]
    out_specs = pl.BlockSpec((TB, NCP), lambda i: (i, 0))

    probs = pl.pallas_call(
        kernel,
        out_shape=jax.ShapeDtypeStruct((B_pad, NCP), jnp.float32),
        grid_spec=pltpu.PrefetchScalarGridSpec(
            num_scalar_prefetch=0,
            grid=(B_pad // TB,),
            in_specs=in_specs,
            out_specs=out_specs,
            scratch_shapes=[
                pltpu.VMEM((TB * L, C1), jnp.float32),                 # act1
                pltpu.VMEM((TB * L2 + 2 * PAD, C1), jnp.float32),      # pooled1 (+edge pad)
                pltpu.VMEM((TB * L2, C2), jnp.float32),                # act2
            ],
        ),
        compiler_params=pltpu.CompilerParams(dimension_semantics=("parallel",)),
    )(X1, w1col, s1, t1, w2t, s2, t2, wf1, bf1, wf2, bf2, wf3, bf3)

    return probs[:B, :n_cls]


# ---------- deterministic synthetic parameters ----------
def init_params(key, L, n_cls):
    ks = jax.random.split(key, 18)

    def nrm(k, shape, scale=0.1):
        return scale * jax.random.normal(k, shape, dtype=jnp.float32)

    return dict(
        w1=nrm(ks[0], (C1, 1, K_TAPS)), b1=nrm(ks[1], (C1,)),
        g1=1.0 + nrm(ks[2], (C1,)), be1=nrm(ks[3], (C1,)),
        m1=nrm(ks[4], (C1,)), v1=0.5 + jax.random.uniform(ks[5], (C1,), dtype=jnp.float32),
        w2=nrm(ks[6], (C2, C1, K_TAPS)), b2=nrm(ks[7], (C2,)),
        g2=1.0 + nrm(ks[8], (C2,)), be2=nrm(ks[9], (C2,)),
        m2=nrm(ks[10], (C2,)), v2=0.5 + jax.random.uniform(ks[11], (C2,), dtype=jnp.float32),
        fc1_w=nrm(ks[12], (H1, C2 * (L // 4))), fc1_b=nrm(ks[13], (H1,)),
        fc2_w=nrm(ks[14], (H2, H1)), fc2_b=nrm(ks[15], (H2,)),
        fc3_w=nrm(ks[16], (n_cls, H2)), fc3_b=nrm(ks[17], (n_cls,)),
    )


# ---------- pure-JAX reference (mirrors the PyTorch forward) ----------
def reference_forward(x, params):
    eps = 1e-5

    def conv_block(h, w, b, g, be, m, v):
        out = lax.conv_general_dilated(
            h, w, window_strides=(1,), padding=((PAD, PAD),),
            dimension_numbers=("NCH", "OIH", "NCH"),
            precision=lax.Precision.HIGHEST)
        out = out + b[None, :, None]
        out = (out - m[None, :, None]) / jnp.sqrt(v[None, :, None] + eps) * g[None, :, None] \
              + be[None, :, None]
        out = jnp.maximum(out, 0.0)
        B, C, L = out.shape
        return out.reshape(B, C, L // 2, 2).max(axis=-1)

    z = conv_block(x, params["w1"], params["b1"], params["g1"], params["be1"],
                   params["m1"], params["v1"])
    z = conv_block(z, params["w2"], params["b2"], params["g2"], params["be2"],
                   params["m2"], params["v2"])
    flat = z.reshape(z.shape[0], -1)
    h = jnp.maximum(flat @ params["fc1_w"].T + params["fc1_b"], 0.0)
    h = jnp.maximum(h @ params["fc2_w"].T + params["fc2_b"], 0.0)
    logits = h @ params["fc3_w"].T + params["fc3_b"]
    return jax.nn.softmax(logits, axis=1)


if __name__ == "__main__":
    key = jax.random.PRNGKey(0)
    L, n_cls = 16, 4                           # input_dimension=16, num_of_classes=4
    params = init_params(jax.random.fold_in(key, 0), L, n_cls)

    # "tiny" exercises batch padding (B < TB); "tiled" exercises grid > 1.
    for case, B in (("tiny", 2), ("tiled", 200)):
        kx, ky = jax.random.split(jax.random.fold_in(key, B))
        x = jax.random.normal(kx, (B, 1, L), dtype=jnp.float32)           # NCW spectrum
        y = jax.nn.one_hot(jax.random.randint(ky, (B,), 0, n_cls), n_cls)  # labels (unused)

        out = jax.block_until_ready(model2_forward(x, y, params, infer=False))
        ref = reference_forward(x, params)

        assert out.shape == (B, n_cls), case
        assert bool(jnp.allclose(jnp.sum(out, axis=1), 1.0, atol=1e-4)), case
        assert bool(jnp.allclose(out, ref, atol=3e-3, rtol=3e-3)), (case, out, ref)

    print("KERNEL_OK")
</pallas_src>

<mosaic_0001>
module attributes {stable_mosaic.version = 11 : i64} {
  func.func @_model2_kernel(%arg0: i32, %arg1: memref<128x8xf32, #tpu.memory_space<vmem>>, %arg2: memref<8x96xf32, #tpu.memory_space<vmem>>, %arg3: memref<1x96xf32, #tpu.memory_space<vmem>>, %arg4: memref<1x96xf32, #tpu.memory_space<vmem>>, %arg5: memref<5x96x54xbf16, #tpu.memory_space<vmem>>, %arg6: memref<1x54xf32, #tpu.memory_space<vmem>>, %arg7: memref<1x54xf32, #tpu.memory_space<vmem>>, %arg8: memref<4x54x512xbf16, #tpu.memory_space<vmem>>, %arg9: memref<1x512xf32, #tpu.memory_space<vmem>>, %arg10: memref<512x128xbf16, #tpu.memory_space<vmem>>, %arg11: memref<1x128xf32, #tpu.memory_space<vmem>>, %arg12: memref<128x128xbf16, #tpu.memory_space<vmem>>, %arg13: memref<1x128xf32, #tpu.memory_space<vmem>>, %arg14: memref<8x128xf32, #tpu.memory_space<vmem>>, %arg15: memref<128x96xf32, #tpu.memory_space<vmem>>, %arg16: memref<68x96xf32, #tpu.memory_space<vmem>>, %arg17: memref<64x54xf32, #tpu.memory_space<vmem>>) attributes {dimension_semantics = [#tpu.dimension_semantics<parallel>], iteration_bounds = array<i64: 1>, scalar_prefetch = 0 : i64, scratch_operands = 3 : i64, tpu.core_type = #tpu.core_type<tc>, window_params = [{transform_indices = @transform_0, window_bounds = array<i64: 128, 8>}, {pipeline_mode = #tpu.pipeline_mode<synchronous>, transform_indices = @transform_1, window_bounds = array<i64: 8, 96>}, {pipeline_mode = #tpu.pipeline_mode<synchronous>, transform_indices = @transform_2, window_bounds = array<i64: 1, 96>}, {pipeline_mode = #tpu.pipeline_mode<synchronous>, transform_indices = @transform_3, window_bounds = array<i64: 1, 96>}, {pipeline_mode = #tpu.pipeline_mode<synchronous>, transform_indices = @transform_4, window_bounds = array<i64: 5, 96, 54>}, {pipeline_mode = #tpu.pipeline_mode<synchronous>, transform_indices = @transform_5, window_bounds = array<i64: 1, 54>}, {pipeline_mode = #tpu.pipeline_mode<synchronous>, transform_indices = @transform_6, window_bounds = array<i64: 1, 54>}, {pipeline_mode = #tpu.pipeline_mode<synchronous>, transform_indices = @transform_7, window_bounds = array<i64: 4, 54, 512>}, {pipeline_mode = #tpu.pipeline_mode<synchronous>, transform_indices = @transform_8, window_bounds = array<i64: 1, 512>}, {pipeline_mode = #tpu.pipeline_mode<synchronous>, transform_indices = @transform_9, window_bounds = array<i64: 512, 128>}, {pipeline_mode = #tpu.pipeline_mode<synchronous>, transform_indices = @transform_10, window_bounds = array<i64: 1, 128>}, {pipeline_mode = #tpu.pipeline_mode<synchronous>, transform_indices = @transform_11, window_bounds = array<i64: 128, 128>}, {pipeline_mode = #tpu.pipeline_mode<synchronous>, transform_indices = @transform_12, window_bounds = array<i64: 1, 128>}, {transform_indices = @transform_13, window_bounds = array<i64: 8, 128>}]} {
    %c0 = arith.constant 0 : index
    %c0_0 = arith.constant 0 : index
    %0 = vector.load %arg1[%c0, %c0_0] : memref<128x8xf32, #tpu.memory_space<vmem>>, vector<128x8xf32>
    %c0_1 = arith.constant 0 : index
    %c0_2 = arith.constant 0 : index
    %1 = vector.load %arg2[%c0_1, %c0_2] : memref<8x96xf32, #tpu.memory_space<vmem>>, vector<8x96xf32>
    %cst = arith.constant dense<0.000000e+00> : vector<128x96xf32>
    %2 = tpu.matmul %0, %1, %cst {dimension_numbers = #tpu.dot_dimension_numbers<[1], [0], [0], [1], [0, 0, 1, 1], [], []>} : vector<128x8xf32>, vector<8x96xf32>, vector<128x96xf32> -> vector<128x96xf32>
    %c0_3 = arith.constant 0 : index
    %c0_4 = arith.constant 0 : index
    %3 = vector.load %arg3[%c0_3, %c0_4] : memref<1x96xf32, #tpu.memory_space<vmem>>, vector<1x96xf32>
    %4 = vector.broadcast %3 : vector<1x96xf32> to vector<128x96xf32>
    %5 = arith.mulf %2, %4 : vector<128x96xf32>
    %c0_5 = arith.constant 0 : index
    %c0_6 = arith.constant 0 : index
    %6 = vector.load %arg4[%c0_5, %c0_6] : memref<1x96xf32, #tpu.memory_space<vmem>>, vector<1x96xf32>
    %7 = vector.broadcast %6 : vector<1x96xf32> to vector<128x96xf32>
    %8 = arith.addf %5, %7 : vector<128x96xf32>
    %cst_7 = arith.constant 0.000000e+00 : f32
    %9 = vector.broadcast %cst_7 : f32 to vector<128x96xf32>
    %10 = arith.maximumf %8, %9 : vector<128x96xf32>
    %c0_8 = arith.constant 0 : index
    %c0_9 = arith.constant 0 : index
    %11 = vector.load %arg15[%c0_8, %c0_9] : memref<128x96xf32, #tpu.memory_space<vmem>>, vector<128x96xf32>
    tpu.vector_store %arg15[%c0_8, %c0_9], %10 {strides = array<i32>} : memref<128x96xf32, #tpu.memory_space<vmem>>, vector<128x96xf32>,
    %c0_10 = arith.constant 0 : index
    %c0_11 = arith.constant 0 : index
    %12 = tpu.strided_load %arg15[%c0_10, %c0_11] {strides = array<i32: 2, 1>} : memref<128x96xf32, #tpu.memory_space<vmem>>, vector<64x96xf32>
    %c1 = arith.constant 1 : index
    %c0_12 = arith.constant 0 : index
    %13 = tpu.strided_load %arg15[%c1, %c0_12] {strides = array<i32: 2, 1>} : memref<128x96xf32, #tpu.memory_space<vmem>>, vector<64x96xf32>
    %14 = arith.maximumf %12, %13 : vector<64x96xf32>
    %cst_13 = arith.constant 0.000000e+00 : f32
    %15 = vector.broadcast %cst_13 : f32 to vector<2x96xf32>
    %c0_14 = arith.constant 0 : index
    %c0_15 = arith.constant 0 : index
    %16 = vector.load %arg16[%c0_14, %c0_15] : memref<68x96xf32, #tpu.memory_space<vmem>>, vector<2x96xf32>
    tpu.vector_store %arg16[%c0_14, %c0_15], %15 {strides = array<i32>} : memref<68x96xf32, #tpu.memory_space<vmem>>, vector<2x96xf32>,
    %c66 = arith.constant 66 : index
    %c0_16 = arith.constant 0 : index
    %17 = vector.load %arg16[%c66, %c0_16] : memref<68x96xf32, #tpu.memory_space<vmem>>, vector<2x96xf32>
    tpu.vector_store %arg16[%c66, %c0_16], %15 {strides = array<i32>} : memref<68x96xf32, #tpu.memory_space<vmem>>, vector<2x96xf32>,
    %c2 = arith.constant 2 : index
    %c0_17 = arith.constant 0 : index
    %18 = vector.load %arg16[%c2, %c0_17] : memref<68x96xf32, #tpu.memory_space<vmem>>, vector<64x96xf32>
    tpu.vector_store %arg16[%c2, %c0_17], %14 {strides = array<i32>} : memref<68x96xf32, #tpu.memory_space<vmem>>, vector<64x96xf32>,
    %19 = tpu.iota {dimensions = array<i32: 0>} : vector<64x1xi32>
    %c8_i32 = arith.constant 8 : i32
    %c0_i32 = arith.constant 0 : i32
    %20 = arith.cmpi eq, %c8_i32, %c0_i32 : i32
    %c1_i32 = arith.constant 1 : i32
    %21 = arith.select %20, %c1_i32, %c8_i32 : i32
    %22 = vector.broadcast %21 : i32 to vector<64x1xi32>
    %23 = arith.remsi %19, %22 : vector<64x1xi32>
    %c0_i32_18 = arith.constant 0 : i32
    %24 = vector.broadcast %c0_i32_18 : i32 to vector<64x1xi32>
    %25 = arith.cmpi ne, %23, %24 : vector<64x1xi32>
    %c0_i32_19 = arith.constant 0 : i32
    %26 = vector.broadcast %c0_i32_19 : i32 to vector<64x1xi32>
    %27 = arith.cmpi slt, %23, %26 : vector<64x1xi32>
    %c0_i32_20 = arith.constant 0 : i32
    %28 = arith.cmpi slt, %21, %c0_i32_20 : i32
    %29 = vector.broadcast %28 : i1 to vector<64x1xi1>
    %30 = vector.broadcast %29 : vector<64x1xi1> to vector<64x1xi1>
    %31 = arith.xori %27, %30 : vector<64x1xi1>
    %32 = arith.andi %31, %25 : vector<64x1xi1>
    %33 = vector.broadcast %21 : i32 to vector<64x1xi32>
    %34 = arith.addi %23, %33 : vector<64x1xi32>
    %35 = arith.select %32, %34, %23 : vector<64x1xi1>, vector<64x1xi32>
    %cst_21 = arith.constant 0.000000e+00 : f32
    %36 = vector.broadcast %cst_21 : f32 to vector<64x54xf32>
    %c2_i32 = arith.constant 2 : i32
    %37 = vector.broadcast %c2_i32 : i32 to vector<64x1xi32>
    %38 = arith.cmpi sge, %35, %37 : vector<64x1xi32>
    %c10_i32 = arith.constant 10 : i32
    %39 = vector.broadcast %c10_i32 : i32 to vector<64x1xi32>
    %40 = arith.cmpi slt, %35, %39 : vector<64x1xi32>
    %41 = arith.andi %38, %40 : vector<64x1xi1>
    %c0_22 = arith.constant 0 : index
    %c0_23 = arith.constant 0 : index
    %42 = vector.load %arg16[%c0_22, %c0_23] : memref<68x96xf32, #tpu.memory_space<vmem>>, vector<64x96xf32>
    %cst_24 = arith.constant 0.000000e+00 : f32
    %43 = vector.shape_cast %41 : vector<64x1xi1> to vector<64x1xi1>
    %44 = vector.broadcast %43 : vector<64x1xi1> to vector<64x96xi1>
    %45 = vector.broadcast %cst_24 : f32 to vector<64x96xf32>
    %46 = arith.select %44, %42, %45 : vector<64x96xi1>, vector<64x96xf32>
    %47 = arith.truncf %46 : vector<64x96xf32> to vector<64x96xbf16>
    %c0_25 = arith.constant 0 : index
    %c0_26 = arith.constant 0 : index
    %c0_27 = arith.constant 0 : index
    %48 = vector.load %arg5[%c0_25, %c0_26, %c0_27] : memref<5x96x54xbf16, #tpu.memory_space<vmem>>, vector<1x96x54xbf16>
    %49 = vector.shape_cast %48 : vector<1x96x54xbf16> to vector<96x54xbf16>
    %cst_28 = arith.constant dense<0.000000e+00> : vector<64x54xf32>
    %50 = tpu.matmul %47, %49, %cst_28 {dimension_numbers = #tpu.dot_dimension_numbers<[1], [0], [0], [1], [0, 0, 1, 1], [], []>} : vector<64x96xbf16>, vector<96x54xbf16>, vector<64x54xf32> -> vector<64x54xf32>
    %51 = arith.addf %36, %50 : vector<64x54xf32>
    %c1_i32_29 = arith.constant 1 : i32
    %52 = vector.broadcast %c1_i32_29 : i32 to vector<64x1xi32>
    %53 = arith.cmpi sge, %35, %52 : vector<64x1xi32>
    %c9_i32 = arith.constant 9 : i32
    %54 = vector.broadcast %c9_i32 : i32 to vector<64x1xi32>
    %55 = arith.cmpi slt, %35, %54 : vector<64x1xi32>
    %56 = arith.andi %53, %55 : vector<64x1xi1>
    %c1_30 = arith.constant 1 : index
    %c0_31 = arith.constant 0 : index
    %57 = vector.load %arg16[%c1_30, %c0_31] : memref<68x96xf32, #tpu.memory_space<vmem>>, vector<64x96xf32>
    %cst_32 = arith.constant 0.000000e+00 : f32
    %58 = vector.shape_cast %56 : vector<64x1xi1> to vector<64x1xi1>
    %59 = vector.broadcast %58 : vector<64x1xi1> to vector<64x96xi1>
    %60 = vector.broadcast %cst_32 : f32 to vector<64x96xf32>
    %61 = arith.select %59, %57, %60 : vector<64x96xi1>, vector<64x96xf32>
    %62 = arith.truncf %61 : vector<64x96xf32> to vector<64x96xbf16>
    %c1_33 = arith.constant 1 : index
    %c0_34 = arith.constant 0 : index
    %c0_35 = arith.constant 0 : index
    %63 = vector.load %arg5[%c1_33, %c0_34, %c0_35] : memref<5x96x54xbf16, #tpu.memory_space<vmem>>, vector<1x96x54xbf16>
    %64 = vector.shape_cast %63 : vector<1x96x54xbf16> to vector<96x54xbf16>
    %cst_36 = arith.constant dense<0.000000e+00> : vector<64x54xf32>
    %65 = tpu.matmul %62, %64, %cst_36 {dimension_numbers = #tpu.dot_dimension_numbers<[1], [0], [0], [1], [0, 0, 1, 1], [], []>} : vector<64x96xbf16>, vector<96x54xbf16>, vector<64x54xf32> -> vector<64x54xf32>
    %66 = arith.addf %51, %65 : vector<64x54xf32>
    %c0_i32_37 = arith.constant 0 : i32
    %67 = vector.broadcast %c0_i32_37 : i32 to vector<64x1xi32>
    %68 = arith.cmpi sge, %35, %67 : vector<64x1xi32>
    %c8_i32_38 = arith.constant 8 : i32
    %69 = vector.broadcast %c8_i32_38 : i32 to vector<64x1xi32>
    %70 = arith.cmpi slt, %35, %69 : vector<64x1xi32>
    %71 = arith.andi %68, %70 : vector<64x1xi1>
    %c2_39 = arith.constant 2 : index
    %c0_40 = arith.constant 0 : index
    %72 = vector.load %arg16[%c2_39, %c0_40] : memref<68x96xf32, #tpu.memory_space<vmem>>, vector<64x96xf32>
    %cst_41 = arith.constant 0.000000e+00 : f32
    %73 = vector.shape_cast %71 : vector<64x1xi1> to vector<64x1xi1>
    %74 = vector.broadcast %73 : vector<64x1xi1> to vector<64x96xi1>
    %75 = vector.broadcast %cst_41 : f32 to vector<64x96xf32>
    %76 = arith.select %74, %72, %75 : vector<64x96xi1>, vector<64x96xf32>
    %77 = arith.truncf %76 : vector<64x96xf32> to vector<64x96xbf16>
    %c2_42 = arith.constant 2 : index
    %c0_43 = arith.constant 0 : index
    %c0_44 = arith.constant 0 : index
    %78 = vector.load %arg5[%c2_42, %c0_43, %c0_44] : memref<5x96x54xbf16, #tpu.memory_space<vmem>>, vector<1x96x54xbf16>
    %79 = vector.shape_cast %78 : vector<1x96x54xbf16> to vector<96x54xbf16>
    %cst_45 = arith.constant dense<0.000000e+00> : vector<64x54xf32>
    %80 = tpu.matmul %77, %79, %cst_45 {dimension_numbers = #tpu.dot_dimension_numbers<[1], [0], [0], [1], [0, 0, 1, 1], [], []>} : vector<64x96xbf16>, vector<96x54xbf16>, vector<64x54xf32> -> vector<64x54xf32>
    %81 = arith.addf %66, %80 : vector<64x54xf32>
    %c-1_i32 = arith.constant -1 : i32
    %82 = vector.broadcast %c-1_i32 : i32 to vector<64x1xi32>
    %83 = arith.cmpi sge, %35, %82 : vector<64x1xi32>
    %c7_i32 = arith.constant 7 : i32
    %84 = vector.broadcast %c7_i32 : i32 to vector<64x1xi32>
    %85 = arith.cmpi slt, %35, %84 : vector<64x1xi32>
    %86 = arith.andi %83, %85 : vector<64x1xi1>
    %c3 = arith.constant 3 : index
    %c0_46 = arith.constant 0 : index
    %87 = vector.load %arg16[%c3, %c0_46] : memref<68x96xf32, #tpu.memory_space<vmem>>, vector<64x96xf32>
    %cst_47 = arith.constant 0.000000e+00 : f32
    %88 = vector.shape_cast %86 : vector<64x1xi1> to vector<64x1xi1>
    %89 = vector.broadcast %88 : vector<64x1xi1> to vector<64x96xi1>
    %90 = vector.broadcast %cst_47 : f32 to vector<64x96xf32>
    %91 = arith.select %89, %87, %90 : vector<64x96xi1>, vector<64x96xf32>
    %92 = arith.truncf %91 : vector<64x96xf32> to vector<64x96xbf16>
    %c3_48 = arith.constant 3 : index
    %c0_49 = arith.constant 0 : index
    %c0_50 = arith.constant 0 : index
    %93 = vector.load %arg5[%c3_48, %c0_49, %c0_50] : memref<5x96x54xbf16, #tpu.memory_space<vmem>>, vector<1x96x54xbf16>
    %94 = vector.shape_cast %93 : vector<1x96x54xbf16> to vector<96x54xbf16>
    %cst_51 = arith.constant dense<0.000000e+00> : vector<64x54xf32>
    %95 = tpu.matmul %92, %94, %cst_51 {dimension_numbers = #tpu.dot_dimension_numbers<[1], [0], [0], [1], [0, 0, 1, 1], [], []>} : vector<64x96xbf16>, vector<96x54xbf16>, vector<64x54xf32> -> vector<64x54xf32>
    %96 = arith.addf %81, %95 : vector<64x54xf32>
    %c-2_i32 = arith.constant -2 : i32
    %97 = vector.broadcast %c-2_i32 : i32 to vector<64x1xi32>
    %98 = arith.cmpi sge, %35, %97 : vector<64x1xi32>
    %c6_i32 = arith.constant 6 : i32
    %99 = vector.broadcast %c6_i32 : i32 to vector<64x1xi32>
    %100 = arith.cmpi slt, %35, %99 : vector<64x1xi32>
    %101 = arith.andi %98, %100 : vector<64x1xi1>
    %c4 = arith.constant 4 : index
    %c0_52 = arith.constant 0 : index
    %102 = vector.load %arg16[%c4, %c0_52] : memref<68x96xf32, #tpu.memory_space<vmem>>, vector<64x96xf32>
    %cst_53 = arith.constant 0.000000e+00 : f32
    %103 = vector.shape_cast %101 : vector<64x1xi1> to vector<64x1xi1>
    %104 = vector.broadcast %103 : vector<64x1xi1> to vector<64x96xi1>
    %105 = vector.broadcast %cst_53 : f32 to vector<64x96xf32>
    %106 = arith.select %104, %102, %105 : vector<64x96xi1>, vector<64x96xf32>
    %107 = arith.truncf %106 : vector<64x96xf32> to vector<64x96xbf16>
    %c4_54 = arith.constant 4 : index
    %c0_55 = arith.constant 0 : index
    %c0_56 = arith.constant 0 : index
    %108 = vector.load %arg5[%c4_54, %c0_55, %c0_56] : memref<5x96x54xbf16, #tpu.memory_space<vmem>>, vector<1x96x54xbf16>
    %109 = vector.shape_cast %108 : vector<1x96x54xbf16> to vector<96x54xbf16>
    %cst_57 = arith.constant dense<0.000000e+00> : vector<64x54xf32>
    %110 = tpu.matmul %107, %109, %cst_57 {dimension_numbers = #tpu.dot_dimension_numbers<[1], [0], [0], [1], [0, 0, 1, 1], [], []>} : vector<64x96xbf16>, vector<96x54xbf16>, vector<64x54xf32> -> vector<64x54xf32>
    %111 = arith.addf %96, %110 : vector<64x54xf32>
    %c0_58 = arith.constant 0 : index
    %c0_59 = arith.constant 0 : index
    %112 = vector.load %arg6[%c0_58, %c0_59] : memref<1x54xf32, #tpu.memory_space<vmem>>, vector<1x54xf32>
    %113 = vector.broadcast %112 : vector<1x54xf32> to vector<64x54xf32>
    %114 = arith.mulf %111, %113 : vector<64x54xf32>
    %c0_60 = arith.constant 0 : index
    %c0_61 = arith.constant 0 : index
    %115 = vector.load %arg7[%c0_60, %c0_61] : memref<1x54xf32, #tpu.memory_space<vmem>>, vector<1x54xf32>
    %116 = vector.broadcast %115 : vector<1x54xf32> to vector<64x54xf32>
    %117 = arith.addf %114, %116 : vector<64x54xf32>
    %cst_62 = arith.constant 0.000000e+00 : f32
    %118 = vector.broadcast %cst_62 : f32 to vector<64x54xf32>
    %119 = arith.maximumf %117, %118 : vector<64x54xf32>
    %c0_63 = arith.constant 0 : index
    %c0_64 = arith.constant 0 : index
    %120 = vector.load %arg17[%c0_63, %c0_64] : memref<64x54xf32, #tpu.memory_space<vmem>>, vector<64x54xf32>
    tpu.vector_store %arg17[%c0_63, %c0_64], %119 {strides = array<i32>} : memref<64x54xf32, #tpu.memory_space<vmem>>, vector<64x54xf32>,
    %cst_65 = arith.constant 0.000000e+00 : f32
    %121 = vector.broadcast %cst_65 : f32 to vector<8x512xf32>
    %c0_66 = arith.constant 0 : index
    %c0_67 = arith.constant 0 : index
    %122 = tpu.strided_load %arg17[%c0_66, %c0_67] {strides = array<i32: 8, 1>} : memref<64x54xf32, #tpu.memory_space<vmem>>, vector<8x54xf32>
    %c1_68 = arith.constant 1 : index
    %c0_69 = arith.constant 0 : index
    %123 = tpu.strided_load %arg17[%c1_68, %c0_69] {strides = array<i32: 8, 1>} : memref<64x54xf32, #tpu.memory_space<vmem>>, vector<8x54xf32>
    %124 = arith.maximumf %122, %123 : vector<8x54xf32>
    %125 = arith.truncf %124 : vector<8x54xf32> to vector<8x54xbf16>
    %c0_70 = arith.constant 0 : index
    %c0_71 = arith.constant 0 : index
    %c0_72 = arith.constant 0 : index
    %126 = vector.load %arg8[%c0_70, %c0_71, %c0_72] : memref<4x54x512xbf16, #tpu.memory_space<vmem>>, vector<1x54x512xbf16>
    %127 = vector.shape_cast %126 : vector<1x54x512xbf16> to vector<54x512xbf16>
    %cst_73 = arith.constant dense<0.000000e+00> : vector<8x512xf32>
    %128 = tpu.matmul %125, %127, %cst_73 {dimension_numbers = #tpu.dot_dimension_numbers<[1], [0], [0], [1], [0, 0, 1, 1], [], []>} : vector<8x54xbf16>, vector<54x512xbf16>, vector<8x512xf32> -> vector<8x512xf32>
    %129 = arith.addf %121, %128 : vector<8x512xf32>
    %c2_74 = arith.constant 2 : index
    %c0_75 = arith.constant 0 : index
    %130 = tpu.strided_load %arg17[%c2_74, %c0_75] {strides = array<i32: 8, 1>} : memref<64x54xf32, #tpu.memory_space<vmem>>, vector<8x54xf32>
    %c3_76 = arith.constant 3 : index
    %c0_77 = arith.constant 0 : index
    %131 = tpu.strided_load %arg17[%c3_76, %c0_77] {strides = array<i32: 8, 1>} : memref<64x54xf32, #tpu.memory_space<vmem>>, vector<8x54xf32>
    %132 = arith.maximumf %130, %131 : vector<8x54xf32>
    %133 = arith.truncf %132 : vector<8x54xf32> to vector<8x54xbf16>
    %c1_78 = arith.constant 1 : index
    %c0_79 = arith.constant 0 : index
    %c0_80 = arith.constant 0 : index
    %134 = vector.load %arg8[%c1_78, %c0_79, %c0_80] : memref<4x54x512xbf16, #tpu.memory_space<vmem>>, vector<1x54x512xbf16>
    %135 = vector.shape_cast %134 : vector<1x54x512xbf16> to vector<54x512xbf16>
    %cst_81 = arith.constant dense<0.000000e+00> : vector<8x512xf32>
    %136 = tpu.matmul %133, %135, %cst_81 {dimension_numbers = #tpu.dot_dimension_numbers<[1], [0], [0], [1], [0, 0, 1, 1], [], []>} : vector<8x54xbf16>, vector<54x512xbf16>, vector<8x512xf32> -> vector<8x512xf32>
    %137 = arith.addf %129, %136 : vector<8x512xf32>
    %c4_82 = arith.constant 4 : index
    %c0_83 = arith.constant 0 : index
    %138 = tpu.strided_load %arg17[%c4_82, %c0_83] {strides = array<i32: 8, 1>} : memref<64x54xf32, #tpu.memory_space<vmem>>, vector<8x54xf32>
    %c5 = arith.constant 5 : index
    %c0_84 = arith.constant 0 : index
    %139 = tpu.strided_load %arg17[%c5, %c0_84] {strides = array<i32: 8, 1>} : memref<64x54xf32, #tpu.memory_space<vmem>>, vector<8x54xf32>
    %140 = arith.maximumf %138, %139 : vector<8x54xf32>
    %141 = arith.truncf %140 : vector<8x54xf32> to vector<8x54xbf16>
    %c2_85 = arith.constant 2 : index
    %c0_86 = arith.constant 0 : index
    %c0_87 = arith.constant 0 : index
    %142 = vector.load %arg8[%c2_85, %c0_86, %c0_87] : memref<4x54x512xbf16, #tpu.memory_space<vmem>>, vector<1x54x512xbf16>
    %143 = vector.shape_cast %142 : vector<1x54x512xbf16> to vector<54x512xbf16>
    %cst_88 = arith.constant dense<0.000000e+00> : vector<8x512xf32>
    %144 = tpu.matmul %141, %143, %cst_88 {dimension_numbers = #tpu.dot_dimension_numbers<[1], [0], [0], [1], [0, 0, 1, 1], [], []>} : vector<8x54xbf16>, vector<54x512xbf16>, vector<8x512xf32> -> vector<8x512xf32>
    %145 = arith.addf %137, %144 : vector<8x512xf32>
    %c6 = arith.constant 6 : index
    %c0_89 = arith.constant 0 : index
    %146 = tpu.strided_load %arg17[%c6, %c0_89] {strides = array<i32: 8, 1>} : memref<64x54xf32, #tpu.memory_space<vmem>>, vector<8x54xf32>
    %c7 = arith.constant 7 : index
    %c0_90 = arith.constant 0 : index
    %147 = tpu.strided_load %arg17[%c7, %c0_90] {strides = array<i32: 8, 1>} : memref<64x54xf32, #tpu.memory_space<vmem>>, vector<8x54xf32>
    %148 = arith.maximumf %146, %147 : vector<8x54xf32>
    %149 = arith.truncf %148 : vector<8x54xf32> to vector<8x54xbf16>
    %c3_91 = arith.constant 3 : index
    %c0_92 = arith.constant 0 : index
    %c0_93 = arith.constant 0 : index
    %150 = vector.load %arg8[%c3_91, %c0_92, %c0_93] : memref<4x54x512xbf16, #tpu.memory_space<vmem>>, vector<1x54x512xbf16>
    %151 = vector.shape_cast %150 : vector<1x54x512xbf16> to vector<54x512xbf16>
    %cst_94 = arith.constant dense<0.000000e+00> : vector<8x512xf32>
    %152 = tpu.matmul %149, %151, %cst_94 {dimension_numbers = #tpu.dot_dimension_numbers<[1], [0], [0], [1], [0, 0, 1, 1], [], []>} : vector<8x54xbf16>, vector<54x512xbf16>, vector<8x512xf32> -> vector<8x512xf32>
    %153 = arith.addf %145, %152 : vector<8x512xf32>
    %c0_95 = arith.constant 0 : index
    %c0_96 = arith.constant 0 : index
    %154 = vector.load %arg9[%c0_95, %c0_96] : memref<1x512xf32, #tpu.memory_space<vmem>>, vector<1x512xf32>
    %155 = vector.broadcast %154 : vector<1x512xf32> to vector<8x512xf32>
    %156 = arith.addf %153, %155 : vector<8x512xf32>
    %cst_97 = arith.constant 0.000000e+00 : f32
    %157 = vector.broadcast %cst_97 : f32 to vector<8x512xf32>
    %158 = arith.maximumf %156, %157 : vector<8x512xf32>
    %159 = arith.truncf %158 : vector<8x512xf32> to vector<8x512xbf16>
    %c0_98 = arith.constant 0 : index
    %c0_99 = arith.constant 0 : index
    %160 = vector.load %arg10[%c0_98, %c0_99] : memref<512x128xbf16, #tpu.memory_space<vmem>>, vector<512x128xbf16>
    %cst_100 = arith.constant dense<0.000000e+00> : vector<8x128xf32>
    %161 = tpu.matmul %159, %160, %cst_100 {dimension_numbers = #tpu.dot_dimension_numbers<[1], [0], [0], [1], [0, 0, 1, 1], [], []>} : vector<8x512xbf16>, vector<512x128xbf16>, vector<8x128xf32> -> vector<8x128xf32>
    %c0_101 = arith.constant 0 : index
    %c0_102 = arith.constant 0 : index
    %162 = vector.load %arg11[%c0_101, %c0_102] : memref<1x128xf32, #tpu.memory_space<vmem>>, vector<1x128xf32>
    %163 = vector.broadcast %162 : vector<1x128xf32> to vector<8x128xf32>
    %164 = arith.addf %161, %163 : vector<8x128xf32>
    %cst_103 = arith.constant 0.000000e+00 : f32
    %165 = vector.broadcast %cst_103 : f32 to vector<8x128xf32>
    %166 = arith.maximumf %164, %165 : vector<8x128xf32>
    %167 = arith.truncf %166 : vector<8x128xf32> to vector<8x128xbf16>
    %c0_104 = arith.constant 0 : index
    %c0_105 = arith.constant 0 : index
    %168 = vector.load %arg12[%c0_104, %c0_105] : memref<128x128xbf16, #tpu.memory_space<vmem>>, vector<128x128xbf16>
    %cst_106 = arith.constant dense<0.000000e+00> : vector<8x128xf32>
    %169 = tpu.matmul %167, %168, %cst_106 {dimension_numbers = #tpu.dot_dimension_numbers<[1], [0], [0], [1], [0, 0, 1, 1], [], []>} : vector<8x128xbf16>, vector<128x128xbf16>, vector<8x128xf32> -> vector<8x128xf32>
    %c0_107 = arith.constant 0 : index
    %c0_108 = arith.constant 0 : index
    %170 = vector.load %arg13[%c0_107, %c0_108] : memref<1x128xf32, #tpu.memory_space<vmem>>, vector<1x128xf32>
    %171 = vector.broadcast %170 : vector<1x128xf32> to vector<8x128xf32>
    %172 = arith.addf %169, %171 : vector<8x128xf32>
    %cst_109 = arith.constant dense<0xFF800000> : vector<8xf32>
    %173 = vector.multi_reduction <maximumf>, %172, %cst_109 [1] : vector<8x128xf32> to vector<8xf32>
    %174 = vector.shape_cast %173 : vector<8xf32> to vector<8x1xf32>
    %175 = vector.broadcast %174 : vector<8x1xf32> to vector<8x128xf32>
    %176 = arith.subf %172, %175 : vector<8x128xf32>
    %177 = math.exp %176 : vector<8x128xf32>
    %cst_110 = arith.constant dense<0.000000e+00> : vector<8xf32>
    %178 = vector.multi_reduction <add>, %177, %cst_110 [1] : vector<8x128xf32> to vector<8xf32>
    %179 = vector.shape_cast %178 : vector<8xf32> to vector<8x1xf32>
    %180 = tpu.reciprocal %179 : vector<8x1xf32> -> vector<8x1xf32>
    %181 = vector.broadcast %180 : vector<8x1xf32> to vector<8x128xf32>
    %182 = arith.mulf %177, %181 : vector<8x128xf32>
    %c0_111 = arith.constant 0 : index
    %c0_112 = arith.constant 0 : index
    %183 = vector.load %arg14[%c0_111, %c0_112] : memref<8x128xf32, #tpu.memory_space<vmem>>, vector<8x128xf32>
    tpu.vector_store %arg14[%c0_111, %c0_112], %182 {strides = array<i32>} : memref<8x128xf32, #tpu.memory_space<vmem>>, vector<8x128xf32>,
    return
  }
  func.func @transform_0(%arg0: i32) -> (i32, i32) {
    %c0_i32 = arith.constant 0 : i32
    %c0_i32_0 = arith.constant 0 : i32
    return %arg0, %c0_i32 : i32, i32
  }
  func.func @transform_1(%arg0: i32) -> (i32, i32) {
    %c0_i32 = arith.constant 0 : i32
    %c0_i32_0 = arith.constant 0 : i32
    %c0_i32_1 = arith.constant 0 : i32
    return %c0_i32, %c0_i32_0 : i32, i32
  }
  func.func @transform_2(%arg0: i32) -> (i32, i32) {
    %c0_i32 = arith.constant 0 : i32
    %c0_i32_0 = arith.constant 0 : i32
    %c0_i32_1 = arith.constant 0 : i32
    return %c0_i32, %c0_i32_0 : i32, i32
  }
  func.func @transform_3(%arg0: i32) -> (i32, i32) {
    %c0_i32 = arith.constant 0 : i32
    %c0_i32_0 = arith.constant 0 : i32
    %c0_i32_1 = arith.constant 0 : i32
    return %c0_i32, %c0_i32_0 : i32, i32
  }
  func.func @transform_4(%arg0: i32) -> (i32, i32, i32) {
    %c0_i32 = arith.constant 0 : i32
    %c0_i32_0 = arith.constant 0 : i32
    %c0_i32_1 = arith.constant 0 : i32
    %c0_i32_2 = arith.constant 0 : i32
    return %c0_i32, %c0_i32_0, %c0_i32_1 : i32, i32, i32
  }
  func.func @transform_5(%arg0: i32) -> (i32, i32) {
    %c0_i32 = arith.constant 0 : i32
    %c0_i32_0 = arith.constant 0 : i32
    %c0_i32_1 = arith.constant 0 : i32
    return %c0_i32, %c0_i32_0 : i32, i32
  }
  func.func @transform_6(%arg0: i32) -> (i32, i32) {
    %c0_i32 = arith.constant 0 : i32
    %c0_i32_0 = arith.constant 0 : i32
    %c0_i32_1 = arith.constant 0 : i32
    return %c0_i32, %c0_i32_0 : i32, i32
  }
  func.func @transform_7(%arg0: i32) -> (i32, i32, i32) {
    %c0_i32 = arith.constant 0 : i32
    %c0_i32_0 = arith.constant 0 : i32
    %c0_i32_1 = arith.constant 0 : i32
    %c0_i32_2 = arith.constant 0 : i32
    return %c0_i32, %c0_i32_0, %c0_i32_1 : i32, i32, i32
  }
  func.func @transform_8(%arg0: i32) -> (i32, i32) {
    %c0_i32 = arith.constant 0 : i32
    %c0_i32_0 = arith.constant 0 : i32
    %c0_i32_1 = arith.constant 0 : i32
    return %c0_i32, %c0_i32_0 : i32, i32
  }
  func.func @transform_9(%arg0: i32) -> (i32, i32) {
    %c0_i32 = arith.constant 0 : i32
    %c0_i32_0 = arith.constant 0 : i32
    %c0_i32_1 = arith.constant 0 : i32
    return %c0_i32, %c0_i32_0 : i32, i32
  }
  func.func @transform_10(%arg0: i32) -> (i32, i32) {
    %c0_i32 = arith.constant 0 : i32
    %c0_i32_0 = arith.constant 0 : i32
    %c0_i32_1 = arith.constant 0 : i32
    return %c0_i32, %c0_i32_0 : i32, i32
  }
  func.func @transform_11(%arg0: i32) -> (i32, i32) {
    %c0_i32 = arith.constant 0 : i32
    %c0_i32_0 = arith.constant 0 : i32
    %c0_i32_1 = arith.constant 0 : i32
    return %c0_i32, %c0_i32_0 : i32, i32
  }
  func.func @transform_12(%arg0: i32) -> (i32, i32) {
    %c0_i32 = arith.constant 0 : i32
    %c0_i32_0 = arith.constant 0 : i32
    %c0_i32_1 = arith.constant 0 : i32
    return %c0_i32, %c0_i32_0 : i32, i32
  }
  func.func @transform_13(%arg0: i32) -> (i32, i32) {
    %c0_i32 = arith.constant 0 : i32
    %c0_i32_0 = arith.constant 0 : i32
    return %arg0, %c0_i32 : i32, i32
  }
}

</mosaic_0001>

<llo_original>
// kernel: tpu_custom_call.1
$region0: #{tpu_custom_call.1}
  #allocation0 [shape = 'u32[]', space=smem, size = 0x4, offset = 0x4, fixed_abs, tag = 'smem constant byte address 0x4 - core index']
  #allocation1 [shape = 'u32[72,128]{1,0:T(1,128)}', space=vmem, size = 0x9000, scoped, tag = 'internal scratch']
  #allocation2 [shape = 'f32[128,96]{1,0:T(8,128)}', space=vmem, size = 0x10000, scoped, tag = 'scratch operand']
  #allocation3 [shape = 'f32[68,96]{1,0:T(8,128)}', space=vmem, size = 0x9000, scoped, tag = 'scratch operand']
  #allocation4 [shape = 'f32[64,54]{1,0:T(8,128)}', space=vmem, size = 0x8000, scoped, tag = 'scratch operand']
  %s0 = inlined_call_operand.vmem [shape: f32[128,8], index: 0, kind: input, shape index: {}]
  %s1 = inlined_call_operand.vmem [shape: f32[8,96], index: 1, kind: input, shape index: {}]
  %s2 = inlined_call_operand.vmem [shape: f32[1,96], index: 2, kind: input, shape index: {}]
  %s3 = inlined_call_operand.vmem [shape: f32[1,96], index: 3, kind: input, shape index: {}]
  %s4 = inlined_call_operand.vmem [shape: bf16[5,96,54], index: 4, kind: input, shape index: {}]
  %s5 = inlined_call_operand.vmem [shape: f32[1,54], index: 5, kind: input, shape index: {}]
  %s6 = inlined_call_operand.vmem [shape: f32[1,54], index: 6, kind: input, shape index: {}]
  %s7 = inlined_call_operand.vmem [shape: bf16[4,54,512], index: 7, kind: input, shape index: {}]
  %s8 = inlined_call_operand.vmem [shape: f32[1,512], index: 8, kind: input, shape index: {}]
  %s9 = inlined_call_operand.vmem [shape: bf16[512,128], index: 9, kind: input, shape index: {}]
  %s10 = inlined_call_operand.vmem [shape: f32[1,128], index: 10, kind: input, shape index: {}]
  %s11 = inlined_call_operand.vmem [shape: bf16[128,128], index: 11, kind: input, shape index: {}]
  %s12 = inlined_call_operand.vmem [shape: f32[1,128], index: 12, kind: input, shape index: {}]
  %s13 = inlined_call_operand.hbm [shape: f32[8,128], index: 13, kind: output, shape index: {}]
  %s14 = sld [smem:[#allocation0]]
  $region62: #{tpu_custom_call.1} parent=0
    _
  %s16 = ssub.s32 1, %s14
  %s17 = scalar_select 0, %s16, %s14
  $region1: #{tpu_custom_call.1} parent=0
    #allocation5 [shape = 'u8[4096]{0}', space=vmem, size = 0x1000, scoped, tag = 'output window, operand 0, single buffered']
    #allocation6 [shape = 's32[1]{0}', space=sflag, size = 0x4, scoped, tag = 'scoped memory for tpu_custom_call.1']
    %18 = vsyncpa [#allocation6], 0
    // Predicated region
    $region2: #{tpu_custom_call.1} parent=1 // pred_check
      _
    $region3: #{tpu_custom_call.1} parent=1 // pred_check_branch
      %20 = sbr.rel (0) target = $region5
    $region4: #{tpu_custom_call.1} parent=1 // pred_region
      _
    $region5: #{tpu_custom_call.1} parent=1 // pred_fallthru
      _
    // Predicated region
    $region6: #{tpu_custom_call.1} parent=1 // pred_check
      _
    $region7: #{tpu_custom_call.1} parent=1 // pred_check_branch
      %22 = sbr.rel (0) target = $region9
    $region8: #{tpu_custom_call.1} parent=1 // pred_region
      _
    $region9: #{tpu_custom_call.1} parent=1 // pred_fallthru
      _
    // Predicated region
    $region10: #{tpu_custom_call.1} parent=1 // pred_check
      _
    $region11: #{tpu_custom_call.1} parent=1 // pred_check_branch
      %24 = sbr.rel (0) target = $region13
    $region12: #{tpu_custom_call.1} parent=1 // pred_region
      _
    $region13: #{tpu_custom_call.1} parent=1 // pred_fallthru
      _
    // Predicated region
    $region14: #{tpu_custom_call.1} parent=1 // pred_check
      _
    $region15: #{tpu_custom_call.1} parent=1 // pred_check_branch
      %26 = sbr.rel (0) target = $region17
    $region16: #{tpu_custom_call.1} parent=1 // pred_region
      _
    $region17: #{tpu_custom_call.1} parent=1 // pred_fallthru
      _
    // Predicated region
    $region18: #{tpu_custom_call.1} parent=1 // pred_check
      _
    $region19: #{tpu_custom_call.1} parent=1 // pred_check_branch
      %28 = sbr.rel (0) target = $region21
    $region20: #{tpu_custom_call.1} parent=1 // pred_region
      _
    $region21: #{tpu_custom_call.1} parent=1 // pred_fallthru
      _
    // Predicated region
    $region22: #{tpu_custom_call.1} parent=1 // pred_check
      _
    $region23: #{tpu_custom_call.1} parent=1 // pred_check_branch
      %30 = sbr.rel (0) target = $region25
    $region24: #{tpu_custom_call.1} parent=1 // pred_region
      _
    $region25: #{tpu_custom_call.1} parent=1 // pred_fallthru
      _
    // Predicated region
    $region26: #{tpu_custom_call.1} parent=1 // pred_check
      _
    $region27: #{tpu_custom_call.1} parent=1 // pred_check_branch
      %32 = sbr.rel (0) target = $region29
    $region28: #{tpu_custom_call.1} parent=1 // pred_region
      _
    $region29: #{tpu_custom_call.1} parent=1 // pred_fallthru
      _
    // Predicated region
    $region30: #{tpu_custom_call.1} parent=1 // pred_check
      _
    $region31: #{tpu_custom_call.1} parent=1 // pred_check_branch
      %34 = sbr.rel (0) target = $region33
    $region32: #{tpu_custom_call.1} parent=1 // pred_region
      _
    $region33: #{tpu_custom_call.1} parent=1 // pred_fallthru
      _
    // Predicated region
    $region34: #{tpu_custom_call.1} parent=1 // pred_check
      _
    $region35: #{tpu_custom_call.1} parent=1 // pred_check_branch
      %36 = sbr.rel (0) target = $region37
    $region36: #{tpu_custom_call.1} parent=1 // pred_region
      _
    $region37: #{tpu_custom_call.1} parent=1 // pred_fallthru
      _
    // Predicated region
    $region38: #{tpu_custom_call.1} parent=1 // pred_check
      _
    $region39: #{tpu_custom_call.1} parent=1 // pred_check_branch
      %38 = sbr.rel (0) target = $region41
    $region40: #{tpu_custom_call.1} parent=1 // pred_region
      _
    $region41: #{tpu_custom_call.1} parent=1 // pred_fallthru
      _
    // Predicated region
    $region42: #{tpu_custom_call.1} parent=1 // pred_check
      _
    $region43: #{tpu_custom_call.1} parent=1 // pred_check_branch
      %40 = sbr.rel (0) target = $region45
    $region44: #{tpu_custom_call.1} parent=1 // pred_region
      _
    $region45: #{tpu_custom_call.1} parent=1 // pred_fallthru
      _
    // Predicated region
    $region46: #{tpu_custom_call.1} parent=1 // pred_check
      _
    $region47: #{tpu_custom_call.1} parent=1 // pred_check_branch
      %42 = sbr.rel (0) target = $region49
    $region48: #{tpu_custom_call.1} parent=1 // pred_region
      _
    $region49: #{tpu_custom_call.1} parent=1 // pred_fallthru
      _
    // Predicated region
    $region50: #{tpu_custom_call.1} parent=1 // pred_check
      _
    $region51: #{tpu_custom_call.1} parent=1 // pred_check_branch
      %44 = sbr.rel (0) target = $region53
    $region52: #{tpu_custom_call.1} parent=1 // pred_region
      _
    $region53: #{tpu_custom_call.1} parent=1 // pred_fallthru
      _
    %v46 = vld [vmem:[%s0] sm:$0xff]
    %v47 = vld [vmem:[%s0 + $0x8] sm:$0xff]
    %v48 = vld [vmem:[%s0 + $0x10] sm:$0xff]
    %v49 = vld [vmem:[%s0 + $0x18] sm:$0xff]
    %v50 = vld [vmem:[%s0 + $0x20] sm:$0xff]
    %v51 = vld [vmem:[%s0 + $0x28] sm:$0xff]
    %v52 = vld [vmem:[%s0 + $0x30] sm:$0xff]
    %v53 = vld [vmem:[%s0 + $0x38] sm:$0xff]
    %v54 = vld [vmem:[%s0 + $0x40] sm:$0xff]
    %v55 = vld [vmem:[%s0 + $0x48] sm:$0xff]
    %v56 = vld [vmem:[%s0 + $0x50] sm:$0xff]
    %v57 = vld [vmem:[%s0 + $0x58] sm:$0xff]
    %v58 = vld [vmem:[%s0 + $0x60] sm:$0xff]
    %v59 = vld [vmem:[%s0 + $0x68] sm:$0xff]
    %v60 = vld [vmem:[%s0 + $0x70] sm:$0xff]
    %v61 = vld [vmem:[%s0 + $0x78] sm:$0xff]
    %v62 = vld [vmem:[%s1] sm:$0xff]
    %vm63 = vcmask 64512
    %v65 = vsel %vm63, %v46, 0
    %v68 = vsel %vm63, %v47, 0
    %v71 = vsel %vm63, %v48, 0
    %v74 = vsel %vm63, %v49, 0
    %v77 = vsel %vm63, %v50, 0
    %v80 = vsel %vm63, %v51, 0
    %v83 = vsel %vm63, %v52, 0
    %v86 = vsel %vm63, %v53, 0
    %v89 = vsel %vm63, %v54, 0
    %v92 = vsel %vm63, %v55, 0
    %v95 = vsel %vm63, %v56, 0
    %v98 = vsel %vm63, %v57, 0
    %v101 = vsel %vm63, %v58, 0
    %v104 = vsel %vm63, %v59, 0
    %v107 = vsel %vm63, %v60, 0
    %v110 = vsel %vm63, %v61, 0
    %112 = vmatpush.msra.mxu0 0.0
    %113 = vmatpush.msra.mxu0 0.0
    %114 = vmatpush.msra.mxu0 0.0
    %115 = vmatpush.msra.mxu0 0.0
    %116 = vmatpush.msra.mxu0 0.0
    %117 = vmatpush.msra.mxu0 0.0
    %118 = vmatpush.msra.mxu0 0.0
    %119 = vmatpush.msra.mxu0 0.0
    %120 = vmatpush.msra.mxu0 0.0
    %121 = vmatpush.msra.mxu0 0.0
    %122 = vmatpush.msra.mxu0 0.0
    %123 = vmatpush.msra.mxu0 0.0
    %124 = vmatpush.msra.mxu0 0.0
    %125 = vmatpush.msra.mxu0 0.0
    %126 = vmatpush.msra.mxu0 0.0
    %127 = vmatpush.msra.mxu0 %v62
    %128 = vmatmul.f32.gmra.mxu0 %v65
    %v129 = vpop.f32.mrf.mxu0
    %v130 = vadd.f32 0.0, %v129
    %131 = vmatmul.f32.gmra.mxu0 %v68
    %v132 = vpop.f32.mrf.mxu0
    %v133 = vadd.f32 0.0, %v132
    %134 = vmatmul.f32.gmra.mxu0 %v71
    %v135 = vpop.f32.mrf.mxu0
    %v136 = vadd.f32 0.0, %v135
    %137 = vmatmul.f32.gmra.mxu0 %v74
    %v138 = vpop.f32.mrf.mxu0
    %v139 = vadd.f32 0.0, %v138
    %140 = vmatmul.f32.gmra.mxu0 %v77
    %v141 = vpop.f32.mrf.mxu0
    %v142 = vadd.f32 0.0, %v141
    %143 = vmatmul.f32.gmra.mxu0 %v80
    %v144 = vpop.f32.mrf.mxu0
    %v145 = vadd.f32 0.0, %v144
    %146 = vmatmul.f32.gmra.mxu0 %v83
    %v147 = vpop.f32.mrf.mxu0
    %v148 = vadd.f32 0.0, %v147
    %149 = vmatmul.f32.gmra.mxu0 %v86
    %v150 = vpop.f32.mrf.mxu0
    %v151 = vadd.f32 0.0, %v150
    %152 = vmatmul.f32.gmra.mxu0 %v89
    %v153 = vpop.f32.mrf.mxu0
    %v154 = vadd.f32 0.0, %v153
    %155 = vmatmul.f32.gmra.mxu0 %v92
    %v156 = vpop.f32.mrf.mxu0
    %v157 = vadd.f32 0.0, %v156
    %158 = vmatmul.f32.gmra.mxu0 %v95
    %v159 = vpop.f32.mrf.mxu0
    %v160 = vadd.f32 0.0, %v159
    %161 = vmatmul.f32.gmra.mxu0 %v98
    %v162 = vpop.f32.mrf.mxu0
    %v163 = vadd.f32 0.0, %v162
    %164 = vmatmul.f32.gmra.mxu0 %v101
    %v165 = vpop.f32.mrf.mxu0
    %v166 = vadd.f32 0.0, %v165
    %167 = vmatmul.f32.gmra.mxu0 %v104
    %v168 = vpop.f32.mrf.mxu0
    %v169 = vadd.f32 0.0, %v168
    %170 = vmatmul.f32.gmra.mxu0 %v107
    %v171 = vpop.f32.mrf.mxu0
    %v172 = vadd.f32 0.0, %v171
    %173 = vmatmul.f32.gmra.mxu0 %v110
    %v174 = vpop.f32.mrf.mxu0
    %v175 = vadd.f32 0.0, %v174
    %176 = vdwg.mxu0
    %v177 = vld [vmem:[%s2] sm:$0x1]
    %v179 = vperm.slane %v177, 0
    %v181 = vmul.f32 %v130, %v179
    %v182 = vmul.f32 %v133, %v179
    %v183 = vmul.f32 %v136, %v179
    %v184 = vmul.f32 %v139, %v179
    %v185 = vmul.f32 %v142, %v179
    %v186 = vmul.f32 %v145, %v179
    %v187 = vmul.f32 %v148, %v179
    %v188 = vmul.f32 %v151, %v179
    %v189 = vmul.f32 %v154, %v179
    %v190 = vmul.f32 %v157, %v179
    %v191 = vmul.f32 %v160, %v179
    %v192 = vmul.f32 %v163, %v179
    %v193 = vmul.f32 %v166, %v179
    %v194 = vmul.f32 %v169, %v179
    %v195 = vmul.f32 %v172, %v179
    %v196 = vmul.f32 %v175, %v179
    %v197 = vld [vmem:[%s3] sm:$0x1]
    %v199 = vperm.slane %v197, 0
    %v201 = vadd.f32 %v181, %v199
    %v202 = vadd.f32 %v182, %v199
    %v203 = vadd.f32 %v183, %v199
    %v204 = vadd.f32 %v184, %v199
    %v205 = vadd.f32 %v185, %v199
    %v206 = vadd.f32 %v186, %v199
    %v207 = vadd.f32 %v187, %v199
    %v208 = vadd.f32 %v188, %v199
    %v209 = vadd.f32 %v189, %v199
    %v210 = vadd.f32 %v190, %v199
    %v211 = vadd.f32 %v191, %v199
    %v212 = vadd.f32 %v192, %v199
    %v213 = vadd.f32 %v193, %v199
    %v214 = vadd.f32 %v194, %v199
    %v215 = vadd.f32 %v195, %v199
    %v216 = vadd.f32 %v196, %v199
    %v217 = vmax.f32 %v201, 0.0
    %v218 = vmax.f32 %v202, 0.0
    %v219 = vmax.f32 %v203, 0.0
    %v220 = vmax.f32 %v204, 0.0
    %v221 = vmax.f32 %v205, 0.0
    %v222 = vmax.f32 %v206, 0.0
    %v223 = vmax.f32 %v207, 0.0
    %v224 = vmax.f32 %v208, 0.0
    %v225 = vmax.f32 %v209, 0.0
    %v226 = vmax.f32 %v210, 0.0
    %v227 = vmax.f32 %v211, 0.0
    %v228 = vmax.f32 %v212, 0.0
    %v229 = vmax.f32 %v213, 0.0
    %v230 = vmax.f32 %v214, 0.0
    %v231 = vmax.f32 %v215, 0.0
    %v232 = vmax.f32 %v216, 0.0
    %vm233 = vcmask 785408
    %234 = vst.msk [vmem:[#allocation2] sm:$0xff] %vm233, %v217
    %235 = vst.msk [vmem:[#allocation2 + $0x8] sm:$0xff] %vm233, %v218
    %236 = vst.msk [vmem:[#allocation2 + $0x10] sm:$0xff] %vm233, %v219
    %237 = vst.msk [vmem:[#allocation2 + $0x18] sm:$0xff] %vm233, %v220
    %238 = vst.msk [vmem:[#allocation2 + $0x20] sm:$0xff] %vm233, %v221
    %239 = vst.msk [vmem:[#allocation2 + $0x28] sm:$0xff] %vm233, %v222
    %240 = vst.msk [vmem:[#allocation2 + $0x30] sm:$0xff] %vm233, %v223
    %241 = vst.msk [vmem:[#allocation2 + $0x38] sm:$0xff] %vm233, %v224
    %242 = vst.msk [vmem:[#allocation2 + $0x40] sm:$0xff] %vm233, %v225
    %243 = vst.msk [vmem:[#allocation2 + $0x48] sm:$0xff] %vm233, %v226
    %244 = vst.msk [vmem:[#allocation2 + $0x50] sm:$0xff] %vm233, %v227
    %245 = vst.msk [vmem:[#allocation2 + $0x58] sm:$0xff] %vm233, %v228
    %246 = vst.msk [vmem:[#allocation2 + $0x60] sm:$0xff] %vm233, %v229
    %247 = vst.msk [vmem:[#allocation2 + $0x68] sm:$0xff] %vm233, %v230
    %248 = vst.msk [vmem:[#allocation2 + $0x70] sm:$0xff] %vm233, %v231
    %249 = vst.msk [vmem:[#allocation2 + $0x78] sm:$0xff] %vm233, %v232
    %v250 = vld [vmem:[#allocation2] ss:$2 sm:$0xff]
    %s251 = scalar_lea.vmem [#allocation2], 16
    %v252 = vld [vmem:[%s251] ss:$2 sm:$0xff]
    %s253 = scalar_lea.vmem [#allocation2], 32
    %v254 = vld [vmem:[%s253] ss:$2 sm:$0xff]
    %s255 = scalar_lea.vmem [#allocation2], 48
    %v256 = vld [vmem:[%s255] ss:$2 sm:$0xff]
    %s257 = scalar_lea.vmem [#allocation2], 64
    %v258 = vld [vmem:[%s257] ss:$2 sm:$0xff]
    %s259 = scalar_lea.vmem [#allocation2], 80
    %v260 = vld [vmem:[%s259] ss:$2 sm:$0xff]
    %s261 = scalar_lea.vmem [#allocation2], 96
    %v262 = vld [vmem:[%s261] ss:$2 sm:$0xff]
    %s263 = scalar_lea.vmem [#allocation2], 112
    %v264 = vld [vmem:[%s263] ss:$2 sm:$0xff]
    %s265 = scalar_lea.vmem [#allocation2], 1
    %v266 = vld [vmem:[%s265] ss:$2 sm:$0xff]
    %s267 = scalar_lea.vmem [#allocation2], 17
    %v268 = vld [vmem:[%s267] ss:$2 sm:$0xff]
    %s269 = scalar_lea.vmem [#allocation2], 33
    %v270 = vld [vmem:[%s269] ss:$2 sm:$0xff]
    %s271 = scalar_lea.vmem [#allocation2], 49
    %v272 = vld [vmem:[%s271] ss:$2 sm:$0xff]
    %s273 = scalar_lea.vmem [#allocation2], 65
    %v274 = vld [vmem:[%s273] ss:$2 sm:$0xff]
    %s275 = scalar_lea.vmem [#allocation2], 81
    %v276 = vld [vmem:[%s275] ss:$2 sm:$0xff]
    %s277 = scalar_lea.vmem [#allocation2], 97
    %v278 = vld [vmem:[%s277] ss:$2 sm:$0xff]
    %s279 = scalar_lea.vmem [#allocation2], 113
    %v280 = vld [vmem:[%s279] ss:$2 sm:$0xff]
    %v281 = vmax.f32 %v250, %v266
    %v282 = vmax.f32 %v252, %v268
    %v283 = vmax.f32 %v254, %v270
    %v284 = vmax.f32 %v256, %v272
    %v285 = vmax.f32 %v258, %v274
    %v286 = vmax.f32 %v260, %v276
    %v287 = vmax.f32 %v262, %v278
    %v288 = vmax.f32 %v264, %v280
    %vm289 = vcmask 779264
    %290 = vst.msk [vmem:[#allocation3] sm:$0x3] %vm289, 0.0
    %291 = vst.msk [vmem:[#allocation3 + $0x42] sm:$0x3] %vm289, 0.0
    %292 = vst.msk [vmem:[#allocation3 + $0x2] sm:$0xff] %vm233, %v281
    %293 = vst.msk [vmem:[#allocation3 + $0xa] sm:$0xff] %vm233, %v282
    %294 = vst.msk [vmem:[#allocation3 + $0x12] sm:$0xff] %vm233, %v283
    %295 = vst.msk [vmem:[#allocation3 + $0x1a] sm:$0xff] %vm233, %v284
    %296 = vst.msk [vmem:[#allocation3 + $0x22] sm:$0xff] %vm233, %v285
    %297 = vst.msk [vmem:[#allocation3 + $0x2a] sm:$0xff] %vm233, %v286
    %298 = vst.msk [vmem:[#allocation3 + $0x32] sm:$0xff] %vm233, %v287
    %299 = vst.msk [vmem:[#allocation3 + $0x3a] sm:$0xff] %vm233, %v288
    %v300 = vlaneseq
    %v301 = vshrl.u32 %v300, 7
    %v302 = vadd.s32 %v301, 8
    %v303 = vadd.s32 %v301, 16
    %v304 = vadd.s32 %v301, 24
    %v305 = vadd.s32 %v301, 32
    %v306 = vadd.s32 %v301, 40
    %v307 = vadd.s32 %v301, 48
    %v308 = vadd.s32 %v301, 56
    %vm309 = vcmp.lt.s32.totalorder %v301, 0
    %v310 = vsub.s32 0, %v301
    %v311 = vsel %vm309, %v310, %v301
    %v312 = vshrl.u32 %v311, 3
    %v313 = vand.u32 %v311, 7
    %v314 = vsub.s32 0, %v313
    %v315 = vsel %vm309, %v314, %v313
    %vm316 = vcmp.lt.s32.totalorder %v302, 0
    %v317 = vsub.s32 0, %v302
    %v318 = vsel %vm316, %v317, %v302
    %v319 = vshrl.u32 %v318, 3
    %v320 = vand.u32 %v318, 7
    %v321 = vsub.s32 0, %v320
    %v322 = vsel %vm316, %v321, %v320
    %vm323 = vcmp.lt.s32.totalorder %v303, 0
    %v324 = vsub.s32 0, %v303
    %v325 = vsel %vm323, %v324, %v303
    %v326 = vshrl.u32 %v325, 3
    %v327 = vand.u32 %v325, 7
    %v328 = vsub.s32 0, %v327
    %v329 = vsel %vm323, %v328, %v327
    %vm330 = vcmp.lt.s32.totalorder %v304, 0
    %v331 = vsub.s32 0, %v304
    %v332 = vsel %vm330, %v331, %v304
    %v333 = vshrl.u32 %v332, 3
    %v334 = vand.u32 %v332, 7
    %v335 = vsub.s32 0, %v334
    %v336 = vsel %vm330, %v335, %v334
    %vm337 = vcmp.lt.s32.totalorder %v305, 0
    %v338 = vsub.s32 0, %v305
    %v339 = vsel %vm337, %v338, %v305
    %v340 = vshrl.u32 %v339, 3
    %v341 = vand.u32 %v339, 7
    %v342 = vsub.s32 0, %v341
    %v343 = vsel %vm337, %v342, %v341
    %vm344 = vcmp.lt.s32.totalorder %v306, 0
    %v345 = vsub.s32 0, %v306
    %v346 = vsel %vm344, %v345, %v306
    %v347 = vshrl.u32 %v346, 3
    %v348 = vand.u32 %v346, 7
    %v349 = vsub.s32 0, %v348
    %v350 = vsel %vm344, %v349, %v348
    %vm351 = vcmp.lt.s32.totalorder %v307, 0
    %v352 = vsub.s32 0, %v307
    %v353 = vsel %vm351, %v352, %v307
    %v354 = vshrl.u32 %v353, 3
    %v355 = vand.u32 %v353, 7
    %v356 = vsub.s32 0, %v355
    %v357 = vsel %vm351, %v356, %v355
    %vm358 = vcmp.lt.s32.totalorder %v308, 0
    %v359 = vsub.s32 0, %v308
    %v360 = vsel %vm358, %v359, %v308
    %v361 = vshrl.u32 %v360, 3
    %v362 = vand.u32 %v360, 7
    %v363 = vsub.s32 0, %v362
    %v364 = vsel %vm358, %v363, %v362
    %vm365 = vcmp.ne.s32.totalorder %v315, 0
    %vm366 = vcmp.ne.s32.totalorder %v322, 0
    %vm367 = vcmp.ne.s32.totalorder %v329, 0
    %vm368 = vcmp.ne.s32.totalorder %v336, 0
    %vm369 = vcmp.ne.s32.totalorder %v343, 0
    %vm370 = vcmp.ne.s32.totalorder %v350, 0
    %vm371 = vcmp.ne.s32.totalorder %v357, 0
    %vm372 = vcmp.ne.s32.totalorder %v364, 0
    %vm373 = vcmp.lt.s32.totalorder %v315, 0
    %vm374 = vcmp.lt.s32.totalorder %v322, 0
    %vm375 = vcmp.lt.s32.totalorder %v329, 0
    %vm376 = vcmp.lt.s32.totalorder %v336, 0
    %vm377 = vcmp.lt.s32.totalorder %v343, 0
    %vm378 = vcmp.lt.s32.totalorder %v350, 0
    %vm379 = vcmp.lt.s32.totalorder %v357, 0
    %vm380 = vcmp.lt.s32.totalorder %v364, 0
    %vm381 = vmand %vm373, %vm365
    %vm382 = vmand %vm374, %vm366
    %vm383 = vmand %vm375, %vm367
    %vm384 = vmand %vm376, %vm368
    %vm385 = vmand %vm377, %vm369
    %vm386 = vmand %vm378, %vm370
    %vm387 = vmand %vm379, %vm371
    %vm388 = vmand %vm380, %vm372
    %v389 = vadd.s32 %v315, 8
    %v390 = vadd.s32 %v322, 8
    %v391 = vadd.s32 %v329, 8
    %v392 = vadd.s32 %v336, 8
    %v393 = vadd.s32 %v343, 8
    %v394 = vadd.s32 %v350, 8
    %v395 = vadd.s32 %v357, 8
    %v396 = vadd.s32 %v364, 8
    %v397 = vsel %vm381, %v389, %v315
    %v398 = vsel %vm382, %v390, %v322
    %v399 = vsel %vm383, %v391, %v329
    %v400 = vsel %vm384, %v392, %v336
    %v401 = vsel %vm385, %v393, %v343
    %v402 = vsel %vm386, %v394, %v350
    %v403 = vsel %vm387, %v395, %v357
    %v404 = vsel %vm388, %v396, %v364
    %vm405 = vcmp.ge.s32.totalorder %v397, 2
    %vm406 = vcmp.ge.s32.totalorder %v398, 2
    %vm407 = vcmp.ge.s32.totalorder %v399, 2
    %vm408 = vcmp.ge.s32.totalorder %v400, 2
    %vm409 = vcmp.ge.s32.totalorder %v401, 2
    %vm410 = vcmp.ge.s32.totalorder %v402, 2
    %vm411 = vcmp.ge.s32.totalorder %v403, 2
    %vm412 = vcmp.ge.s32.totalorder %v404, 2
    %vm413 = vcmp.lt.s32.totalorder %v397, 10
    %vm414 = vcmp.lt.s32.totalorder %v398, 10
    %vm415 = vcmp.lt.s32.totalorder %v399, 10
    %vm416 = vcmp.lt.s32.totalorder %v400, 10
    %vm417 = vcmp.lt.s32.totalorder %v401, 10
    %vm418 = vcmp.lt.s32.totalorder %v402, 10
    %vm419 = vcmp.lt.s32.totalorder %v403, 10
    %vm420 = vcmp.lt.s32.totalorder %v404, 10
    %vm421 = vmand %vm405, %vm413
    %vm422 = vmand %vm406, %vm414
    %vm423 = vmand %vm407, %vm415
    %vm424 = vmand %vm408, %vm416
    %vm425 = vmand %vm409, %vm417
    %vm426 = vmand %vm410, %vm418
    %vm427 = vmand %vm411, %vm419
    %vm428 = vmand %vm412, %vm420
    %v429 = vld [vmem:[#allocation3] sm:$0xff]
    %v430 = vld [vmem:[#allocation3 + $0x8] sm:$0xff]
    %v431 = vld [vmem:[#allocation3 + $0x10] sm:$0xff]
    %v432 = vld [vmem:[#allocation3 + $0x18] sm:$0xff]
    %v433 = vld [vmem:[#allocation3 + $0x20] sm:$0xff]
    %v434 = vld [vmem:[#allocation3 + $0x28] sm:$0xff]
    %v435 = vld [vmem:[#allocation3 + $0x30] sm:$0xff]
    %v436 = vld [vmem:[#allocation3 + $0x38] sm:$0xff]
    %v437 = vsel %vm421, 1, 0
    %v438 = vsel %vm422, 1, 0
    %v439 = vsel %vm423, 1, 0
    %v440 = vsel %vm424, 1, 0
    %v441 = vsel %vm425, 1, 0
    %v442 = vsel %vm426, 1, 0
    %v443 = vsel %vm427, 1, 0
    %v444 = vsel %vm428, 1, 0
    %vm445 = vcmp.eq.s32.totalorder %v437, 1
    %vm446 = vcmp.eq.s32.totalorder %v438, 1
    %vm447 = vcmp.eq.s32.totalorder %v439, 1
    %vm448 = vcmp.eq.s32.totalorder %v440, 1
    %vm449 = vcmp.eq.s32.totalorder %v441, 1
    %vm450 = vcmp.eq.s32.totalorder %v442, 1
    %vm451 = vcmp.eq.s32.totalorder %v443, 1
    %vm452 = vcmp.eq.s32.totalorder %v444, 1
    %v453 = vsel %vm445, %v429, 0.0
    %v454 = vsel %vm446, %v430, 0.0
    %v455 = vsel %vm447, %v431, 0.0
    %v456 = vsel %vm448, %v432, 0.0
    %v457 = vsel %vm449, %v433, 0.0
    %v458 = vsel %vm450, %v434, 0.0
    %v459 = vsel %vm451, %v435, 0.0
    %v460 = vsel %vm452, %v436, 0.0
    %v461 = vpack.c.bf16 %v454, %v453
    %v462 = vpack.c.bf16 %v456, %v455
    %v463 = vpack.c.bf16 %v458, %v457
    %v464 = vpack.c.bf16 %v460, %v459
    %v465 = vld [vmem:[%s4] sm:$0xf]
    %v466 = vld [vmem:[%s4 + $0x4] sm:$0xf]
    %v467 = vld [vmem:[%s4 + $0x8] sm:$0xf]
    %v468 = vld [vmem:[%s4 + $0xc] sm:$0xf]
    %v469 = vld [vmem:[%s4 + $0x10] sm:$0xf]
    %v470 = vld [vmem:[%s4 + $0x14] sm:$0xf]
    %v471 = vld [vmem:[%s4 + $0x18] sm:$0xf]
    %v472 = vld [vmem:[%s4 + $0x1c] sm:$0xf]
    %v473 = vld [vmem:[%s4 + $0x20] sm:$0xf]
    %v474 = vld [vmem:[%s4 + $0x24] sm:$0xf]
    %v475 = vld [vmem:[%s4 + $0x28] sm:$0xf]
    %v476 = vld [vmem:[%s4 + $0x2c] sm:$0xf]
    %vm477 = vcmp.ge.s32.totalorder %v397, 1
    %vm478 = vcmp.ge.s32.totalorder %v398, 1
    %vm479 = vcmp.ge.s32.totalorder %v399, 1
    %vm480 = vcmp.ge.s32.totalorder %v400, 1
    %vm481 = vcmp.ge.s32.totalorder %v401, 1
    %vm482 = vcmp.ge.s32.totalorder %v402, 1
    %vm483 = vcmp.ge.s32.totalorder %v403, 1
    %vm484 = vcmp.ge.s32.totalorder %v404, 1
    %vm485 = vcmp.lt.s32.totalorder %v397, 9
    %vm486 = vcmp.lt.s32.totalorder %v398, 9
    %vm487 = vcmp.lt.s32.totalorder %v399, 9
    %vm488 = vcmp.lt.s32.totalorder %v400, 9
    %vm489 = vcmp.lt.s32.totalorder %v401, 9
    %vm490 = vcmp.lt.s32.totalorder %v402, 9
    %vm491 = vcmp.lt.s32.totalorder %v403, 9
    %vm492 = vcmp.lt.s32.totalorder %v404, 9
    %vm493 = vmand %vm477, %vm485
    %vm494 = vmand %vm478, %vm486
    %vm495 = vmand %vm479, %vm487
    %vm496 = vmand %vm480, %vm488
    %vm497 = vmand %vm481, %vm489
    %vm498 = vmand %vm482, %vm490
    %vm499 = vmand %vm483, %vm491
    %vm500 = vmand %vm484, %vm492
    %v501 = vld [vmem:[#allocation3 + $0x1] sm:$0xff]
    %v502 = vld [vmem:[#allocation3 + $0x9] sm:$0xff]
    %v503 = vld [vmem:[#allocation3 + $0x11] sm:$0xff]
    %v504 = vld [vmem:[#allocation3 + $0x19] sm:$0xff]
    %v505 = vld [vmem:[#allocation3 + $0x21] sm:$0xff]
    %v506 = vld [vmem:[#allocation3 + $0x29] sm:$0xff]
    %v507 = vld [vmem:[#allocation3 + $0x31] sm:$0xff]
    %v508 = vld [vmem:[#allocation3 + $0x39] sm:$0xff]
    %v509 = vsel %vm493, 1, 0
    %v510 = vsel %vm494, 1, 0
    %v511 = vsel %vm495, 1, 0
    %v512 = vsel %vm496, 1, 0
    %v513 = vsel %vm497, 1, 0
    %v514 = vsel %vm498, 1, 0
    %v515 = vsel %vm499, 1, 0
    %v516 = vsel %vm500, 1, 0
    %vm517 = vcmp.eq.s32.totalorder %v509, 1
    %vm518 = vcmp.eq.s32.totalorder %v510, 1
    %vm519 = vcmp.eq.s32.totalorder %v511, 1
    %vm520 = vcmp.eq.s32.totalorder %v512, 1
    %vm521 = vcmp.eq.s32.totalorder %v513, 1
    %vm522 = vcmp.eq.s32.totalorder %v514, 1
    %vm523 = vcmp.eq.s32.totalorder %v515, 1
    %vm524 = vcmp.eq.s32.totalorder %v516, 1
    %v525 = vsel %vm517, %v501, 0.0
    %v526 = vsel %vm518, %v502, 0.0
    %v527 = vsel %vm519, %v503, 0.0
    %v528 = vsel %vm520, %v504, 0.0
    %v529 = vsel %vm521, %v505, 0.0
    %v530 = vsel %vm522, %v506, 0.0
    %v531 = vsel %vm523, %v507, 0.0
    %v532 = vsel %vm524, %v508, 0.0
    %v533 = vpack.c.bf16 %v526, %v525
    %v534 = vpack.c.bf16 %v528, %v527
    %v535 = vpack.c.bf16 %v530, %v529
    %v536 = vpack.c.bf16 %v532, %v531
    %s537 = scalar_lea.vmem %s4, 48
    %v538 = vld [vmem:[%s537] sm:$0xf]
    %v539 = vld [vmem:[%s537 + $0x4] sm:$0xf]
    %v540 = vld [vmem:[%s537 + $0x8] sm:$0xf]
    %v541 = vld [vmem:[%s537 + $0xc] sm:$0xf]
    %v542 = vld [vmem:[%s537 + $0x10] sm:$0xf]
    %v543 = vld [vmem:[%s537 + $0x14] sm:$0xf]
    %v544 = vld [vmem:[%s537 + $0x18] sm:$0xf]
    %v545 = vld [vmem:[%s537 + $0x1c] sm:$0xf]
    %v546 = vld [vmem:[%s537 + $0x20] sm:$0xf]
    %v547 = vld [vmem:[%s537 + $0x24] sm:$0xf]
    %v548 = vld [vmem:[%s537 + $0x28] sm:$0xf]
    %v549 = vld [vmem:[%s537 + $0x2c] sm:$0xf]
    %v562 = vunpack.c.l.b16 %v538
    %v563 = vunpack.c.l.b16 %v539
    %v564 = vunpack.c.l.b16 %v540
    %v565 = vunpack.c.l.b16 %v541
    %v566 = vunpack.c.l.b16 %v542
    %v567 = vunpack.c.l.b16 %v543
    %v568 = vunpack.c.l.b16 %v544
    %v569 = vunpack.c.l.b16 %v545
    %v570 = vunpack.c.l.b16 %v546
    %v571 = vunpack.c.l.b16 %v547
    %v572 = vunpack.c.l.b16 %v548
    %v573 = vunpack.c.l.b16 %v549
    %v574 = vpack.c.b16 %v563, %v562
    %v575 = vpack.c.b16 %v565, %v564
    %v576 = vpack.c.b16 %v567, %v566
    %v577 = vpack.c.b16 %v569, %v568
    %v578 = vpack.c.b16 %v571, %v570
    %v579 = vpack.c.b16 %v573, %v572
    %v587 = vsel %vm233, %v533, 0
    %v590 = vsel %vm233, %v534, 0
    %v593 = vsel %vm233, %v535, 0
    %v596 = vsel %vm233, %v536, 0
    %598 = vmatpush.bf16.msra.mxu0 0
    %599 = vmatpush.bf16.msra.mxu0 0
    %600 = vmatpush.bf16.msra.mxu0 %v579
    %601 = vmatpush.bf16.msra.mxu0 %v578
    %602 = vmatpush.bf16.msra.mxu0 %v577
    %603 = vmatpush.bf16.msra.mxu0 %v576
    %604 = vmatpush.bf16.msra.mxu0 %v575
    %605 = vmatpush.bf16.msra.mxu0 %v574
    %606 = vmatmul.bf16.gmra.mxu0 %v587
    %v607 = vpop.f32.mrf.mxu0
    %v608 = vadd.f32 0.0, %v607
    %v609 = vpop.f32.mrf.mxu0
    %v610 = vadd.f32 0.0, %v609
    %611 = vmatmul.bf16.gmra.mxu0 %v590
    %v612 = vpop.f32.mrf.mxu0
    %v613 = vadd.f32 0.0, %v612
    %v614 = vpop.f32.mrf.mxu0
    %v615 = vadd.f32 0.0, %v614
    %616 = vmatmul.bf16.gmra.mxu0 %v593
    %v617 = vpop.f32.mrf.mxu0
    %v618 = vadd.f32 0.0, %v617
    %v619 = vpop.f32.mrf.mxu0
    %v620 = vadd.f32 0.0, %v619
    %621 = vmatmul.bf16.gmra.mxu0 %v596
    %v622 = vpop.f32.mrf.mxu0
    %v623 = vadd.f32 0.0, %v622
    %v624 = vpop.f32.mrf.mxu0
    %v625 = vadd.f32 0.0, %v624
    %626 = vdwg.mxu0
    %v639 = vunpack.c.l.b16 %v465
    %v640 = vunpack.c.l.b16 %v466
    %v641 = vunpack.c.l.b16 %v467
    %v642 = vunpack.c.l.b16 %v468
    %v643 = vunpack.c.l.b16 %v469
    %v644 = vunpack.c.l.b16 %v470
    %v645 = vunpack.c.l.b16 %v471
    %v646 = vunpack.c.l.b16 %v472
    %v647 = vunpack.c.l.b16 %v473
    %v648 = vunpack.c.l.b16 %v474
    %v649 = vunpack.c.l.b16 %v475
    %v650 = vunpack.c.l.b16 %v476
    %v651 = vpack.c.b16 %v640, %v639
    %v652 = vpack.c.b16 %v642, %v641
    %v653 = vpack.c.b16 %v644, %v643
    %v654 = vpack.c.b16 %v646, %v645
    %v655 = vpack.c.b16 %v648, %v647
    %v656 = vpack.c.b16 %v650, %v649
    %v664 = vsel %vm233, %v461, 0
    %v667 = vsel %vm233, %v462, 0
    %v670 = vsel %vm233, %v463, 0
    %v673 = vsel %vm233, %v464, 0
    %675 = vmatpush.bf16.msra.mxu0 0
    %676 = vmatpush.bf16.msra.mxu0 0
    %677 = vmatpush.bf16.msra.mxu0 %v656
    %678 = vmatpush.bf16.msra.mxu0 %v655
    %679 = vmatpush.bf16.msra.mxu0 %v654
    %680 = vmatpush.bf16.msra.mxu0 %v653
    %681 = vmatpush.bf16.msra.mxu0 %v652
    %682 = vmatpush.bf16.msra.mxu0 %v651
    %683 = vmatmul.bf16.gmra.mxu0 %v664
    %v684 = vpop.f32.mrf.mxu0
    %v685 = vadd.f32 %v608, %v684
    %v686 = vpop.f32.mrf.mxu0
    %v687 = vadd.f32 %v610, %v686
    %688 = vmatmul.bf16.gmra.mxu0 %v667
    %v689 = vpop.f32.mrf.mxu0
    %v690 = vadd.f32 %v613, %v689
    %v691 = vpop.f32.mrf.mxu0
    %v692 = vadd.f32 %v615, %v691
    %693 = vmatmul.bf16.gmra.mxu0 %v670
    %v694 = vpop.f32.mrf.mxu0
    %v695 = vadd.f32 %v618, %v694
    %v696 = vpop.f32.mrf.mxu0
    %v697 = vadd.f32 %v620, %v696
    %698 = vmatmul.bf16.gmra.mxu0 %v673
    %v699 = vpop.f32.mrf.mxu0
    %v700 = vadd.f32 %v623, %v699
    %v701 = vpop.f32.mrf.mxu0
    %v702 = vadd.f32 %v625, %v701
    %703 = vdwg.mxu0
    %vm704 = vcmp.ge.s32.totalorder %v397, 0
    %vm705 = vcmp.ge.s32.totalorder %v398, 0
    %vm706 = vcmp.ge.s32.totalorder %v399, 0
    %vm707 = vcmp.ge.s32.totalorder %v400, 0
    %vm708 = vcmp.ge.s32.totalorder %v401, 0
    %vm709 = vcmp.ge.s32.totalorder %v402, 0
    %vm710 = vcmp.ge.s32.totalorder %v403, 0
    %vm711 = vcmp.ge.s32.totalorder %v404, 0
    %vm712 = vcmp.lt.s32.totalorder %v397, 8
    %vm713 = vcmp.lt.s32.totalorder %v398, 8
    %vm714 = vcmp.lt.s32.totalorder %v399, 8
    %vm715 = vcmp.lt.s32.totalorder %v400, 8
    %vm716 = vcmp.lt.s32.totalorder %v401, 8
    %vm717 = vcmp.lt.s32.totalorder %v402, 8
    %vm718 = vcmp.lt.s32.totalorder %v403, 8
    %vm719 = vcmp.lt.s32.totalorder %v404, 8
    %vm720 = vmand %vm704, %vm712
    %vm721 = vmand %vm705, %vm713
    %vm722 = vmand %vm706, %vm714
    %vm723 = vmand %vm707, %vm715
    %vm724 = vmand %vm708, %vm716
    %vm725 = vmand %vm709, %vm717
    %vm726 = vmand %vm710, %vm718
    %vm727 = vmand %vm711, %vm719
    %v728 = vld [vmem:[#allocation3 + $0x2] sm:$0xff]
    %v729 = vld [vmem:[#allocation3 + $0xa] sm:$0xff]
    %v730 = vld [vmem:[#allocation3 + $0x12] sm:$0xff]
    %v731 = vld [vmem:[#allocation3 + $0x1a] sm:$0xff]
    %v732 = vld [vmem:[#allocation3 + $0x22] sm:$0xff]
    %v733 = vld [vmem:[#allocation3 + $0x2a] sm:$0xff]
    %v734 = vld [vmem:[#allocation3 + $0x32] sm:$0xff]
    %v735 = vld [vmem:[#allocation3 + $0x3a] sm:$0xff]
    %v736 = vsel %vm720, 1, 0
    %v737 = vsel %vm721, 1, 0
    %v738 = vsel %vm722, 1, 0
    %v739 = vsel %vm723, 1, 0
    %v740 = vsel %vm724, 1, 0
    %v741 = vsel %vm725, 1, 0
    %v742 = vsel %vm726, 1, 0
    %v743 = vsel %vm727, 1, 0
    %vm744 = vcmp.eq.s32.totalorder %v736, 1
    %vm745 = vcmp.eq.s32.totalorder %v737, 1
    %vm746 = vcmp.eq.s32.totalorder %v738, 1
    %vm747 = vcmp.eq.s32.totalorder %v739, 1
    %vm748 = vcmp.eq.s32.totalorder %v740, 1
    %vm749 = vcmp.eq.s32.totalorder %v741, 1
    %vm750 = vcmp.eq.s32.totalorder %v742, 1
    %vm751 = vcmp.eq.s32.totalorder %v743, 1
    %v752 = vsel %vm744, %v728, 0.0
    %v753 = vsel %vm745, %v729, 0.0
    %v754 = vsel %vm746, %v730, 0.0
    %v755 = vsel %vm747, %v731, 0.0
    %v756 = vsel %vm748, %v732, 0.0
    %v757 = vsel %vm749, %v733, 0.0
    %v758 = vsel %vm750, %v734, 0.0
    %v759 = vsel %vm751, %v735, 0.0
    %v760 = vpack.c.bf16 %v753, %v752
    %v761 = vpack.c.bf16 %v755, %v754
    %v762 = vpack.c.bf16 %v757, %v756
    %v763 = vpack.c.bf16 %v759, %v758
    %s764 = scalar_lea.vmem %s4, 96
    %v765 = vld [vmem:[%s764] sm:$0xf]
    %v766 = vld [vmem:[%s764 + $0x4] sm:$0xf]
    %v767 = vld [vmem:[%s764 + $0x8] sm:$0xf]
    %v768 = vld [vmem:[%s764 + $0xc] sm:$0xf]
    %v769 = vld [vmem:[%s764 + $0x10] sm:$0xf]
    %v770 = vld [vmem:[%s764 + $0x14] sm:$0xf]
    %v771 = vld [vmem:[%s764 + $0x18] sm:$0xf]
    %v772 = vld [vmem:[%s764 + $0x1c] sm:$0xf]
    %v773 = vld [vmem:[%s764 + $0x20] sm:$0xf]
    %v774 = vld [vmem:[%s764 + $0x24] sm:$0xf]
    %v775 = vld [vmem:[%s764 + $0x28] sm:$0xf]
    %v776 = vld [vmem:[%s764 + $0x2c] sm:$0xf]
    %v789 = vunpack.c.l.b16 %v765
    %v790 = vunpack.c.l.b16 %v766
    %v791 = vunpack.c.l.b16 %v767
    %v792 = vunpack.c.l.b16 %v768
    %v793 = vunpack.c.l.b16 %v769
    %v794 = vunpack.c.l.b16 %v770
    %v795 = vunpack.c.l.b16 %v771
    %v796 = vunpack.c.l.b16 %v772
    %v797 = vunpack.c.l.b16 %v773
    %v798 = vunpack.c.l.b16 %v774
    %v799 = vunpack.c.l.b16 %v775
    %v800 = vunpack.c.l.b16 %v776
    %v801 = vpack.c.b16 %v790, %v789
    %v802 = vpack.c.b16 %v792, %v791
    %v803 = vpack.c.b16 %v794, %v793
    %v804 = vpack.c.b16 %v796, %v795
    %v805 = vpack.c.b16 %v798, %v797
    %v806 = vpack.c.b16 %v800, %v799
    %v814 = vsel %vm233, %v760, 0
    %v817 = vsel %vm233, %v761, 0
    %v820 = vsel %vm233, %v762, 0
    %v823 = vsel %vm233, %v763, 0
    %825 = vmatpush.bf16.msra.mxu0 0
    %826 = vmatpush.bf16.msra.mxu0 0
    %827 = vmatpush.bf16.msra.mxu0 %v806
    %828 = vmatpush.bf16.msra.mxu0 %v805
    %829 = vmatpush.bf16.msra.mxu0 %v804
    %830 = vmatpush.bf16.msra.mxu0 %v803
    %831 = vmatpush.bf16.msra.mxu0 %v802
    %832 = vmatpush.bf16.msra.mxu0 %v801
    %833 = vmatmul.bf16.gmra.mxu0 %v814
    %v834 = vpop.f32.mrf.mxu0
    %v835 = vadd.f32 0.0, %v834
    %v836 = vpop.f32.mrf.mxu0
    %v837 = vadd.f32 0.0, %v836
    %838 = vmatmul.bf16.gmra.mxu0 %v817
    %v839 = vpop.f32.mrf.mxu0
    %v840 = vadd.f32 0.0, %v839
    %v841 = vpop.f32.mrf.mxu0
    %v842 = vadd.f32 0.0, %v841
    %843 = vmatmul.bf16.gmra.mxu0 %v820
    %v844 = vpop.f32.mrf.mxu0
    %v845 = vadd.f32 0.0, %v844
    %v846 = vpop.f32.mrf.mxu0
    %v847 = vadd.f32 0.0, %v846
    %848 = vmatmul.bf16.gmra.mxu0 %v823
    %v849 = vpop.f32.mrf.mxu0
    %v850 = vadd.f32 0.0, %v849
    %v851 = vpop.f32.mrf.mxu0
    %v852 = vadd.f32 0.0, %v851
    %853 = vdwg.mxu0
    %v854 = vadd.f32 %v685, %v835
    %v855 = vadd.f32 %v687, %v837
    %v856 = vadd.f32 %v690, %v840
    %v857 = vadd.f32 %v692, %v842
    %v858 = vadd.f32 %v695, %v845
    %v859 = vadd.f32 %v697, %v847
    %v860 = vadd.f32 %v700, %v850
    %v861 = vadd.f32 %v702, %v852
    %vm862 = vcmp.ge.s32.totalorder %v397, 4294967295
    %vm863 = vcmp.ge.s32.totalorder %v398, 4294967295
    %vm864 = vcmp.ge.s32.totalorder %v399, 4294967295
    %vm865 = vcmp.ge.s32.totalorder %v400, 4294967295
    %vm866 = vcmp.ge.s32.totalorder %v401, 4294967295
    %vm867 = vcmp.ge.s32.totalorder %v402, 4294967295
    %vm868 = vcmp.ge.s32.totalorder %v403, 4294967295
    %vm869 = vcmp.ge.s32.totalorder %v404, 4294967295
    %vm870 = vcmp.lt.s32.totalorder %v397, 7
    %vm871 = vcmp.lt.s32.totalorder %v398, 7
    %vm872 = vcmp.lt.s32.totalorder %v399, 7
    %vm873 = vcmp.lt.s32.totalorder %v400, 7
    %vm874 = vcmp.lt.s32.totalorder %v401, 7
    %vm875 = vcmp.lt.s32.totalorder %v402, 7
    %vm876 = vcmp.lt.s32.totalorder %v403, 7
    %vm877 = vcmp.lt.s32.totalorder %v404, 7
    %vm878 = vmand %vm862, %vm870
    %vm879 = vmand %vm863, %vm871
    %vm880 = vmand %vm864, %vm872
    %vm881 = vmand %vm865, %vm873
    %vm882 = vmand %vm866, %vm874
    %vm883 = vmand %vm867, %vm875
    %vm884 = vmand %vm868, %vm876
    %vm885 = vmand %vm869, %vm877
    %v886 = vld [vmem:[#allocation3 + $0x3] sm:$0xff]
    %v887 = vld [vmem:[#allocation3 + $0xb] sm:$0xff]
    %v888 = vld [vmem:[#allocation3 + $0x13] sm:$0xff]
    %v889 = vld [vmem:[#allocation3 + $0x1b] sm:$0xff]
    %v890 = vld [vmem:[#allocation3 + $0x23] sm:$0xff]
    %v891 = vld [vmem:[#allocation3 + $0x2b] sm:$0xff]
    %v892 = vld [vmem:[#allocation3 + $0x33] sm:$0xff]
    %v893 = vld [vmem:[#allocation3 + $0x3b] sm:$0xff]
    %v894 = vsel %vm878, 1, 0
    %v895 = vsel %vm879, 1, 0
    %v896 = vsel %vm880, 1, 0
    %v897 = vsel %vm881, 1, 0
    %v898 = vsel %vm882, 1, 0
    %v899 = vsel %vm883, 1, 0
    %v900 = vsel %vm884, 1, 0
    %v901 = vsel %vm885, 1, 0
    %vm902 = vcmp.eq.s32.totalorder %v894, 1
    %vm903 = vcmp.eq.s32.totalorder %v895, 1
    %vm904 = vcmp.eq.s32.totalorder %v896, 1
    %vm905 = vcmp.eq.s32.totalorder %v897, 1
    %vm906 = vcmp.eq.s32.totalorder %v898, 1
    %vm907 = vcmp.eq.s32.totalorder %v899, 1
    %vm908 = vcmp.eq.s32.totalorder %v900, 1
    %vm909 = vcmp.eq.s32.totalorder %v901, 1
    %v910 = vsel %vm902, %v886, 0.0
    %v911 = vsel %vm903, %v887, 0.0
    %v912 = vsel %vm904, %v888, 0.0
    %v913 = vsel %vm905, %v889, 0.0
    %v914 = vsel %vm906, %v890, 0.0
    %v915 = vsel %vm907, %v891, 0.0
    %v916 = vsel %vm908, %v892, 0.0
    %v917 = vsel %vm909, %v893, 0.0
    %v918 = vpack.c.bf16 %v911, %v910
    %v919 = vpack.c.bf16 %v913, %v912
    %v920 = vpack.c.bf16 %v915, %v914
    %v921 = vpack.c.bf16 %v917, %v916
    %s922 = scalar_lea.vmem %s4, 144
    %v923 = vld [vmem:[%s922] sm:$0xf]
    %v924 = vld [vmem:[%s922 + $0x4] sm:$0xf]
    %v925 = vld [vmem:[%s922 + $0x8] sm:$0xf]
    %v926 = vld [vmem:[%s922 + $0xc] sm:$0xf]
    %v927 = vld [vmem:[%s922 + $0x10] sm:$0xf]
    %v928 = vld [vmem:[%s922 + $0x14] sm:$0xf]
    %v929 = vld [vmem:[%s922 + $0x18] sm:$0xf]
    %v930 = vld [vmem:[%s922 + $0x1c] sm:$0xf]
    %v931 = vld [vmem:[%s922 + $0x20] sm:$0xf]
    %v932 = vld [vmem:[%s922 + $0x24] sm:$0xf]
    %v933 = vld [vmem:[%s922 + $0x28] sm:$0xf]
    %v934 = vld [vmem:[%s922 + $0x2c] sm:$0xf]
    %v947 = vunpack.c.l.b16 %v923
    %v948 = vunpack.c.l.b16 %v924
    %v949 = vunpack.c.l.b16 %v925
    %v950 = vunpack.c.l.b16 %v926
    %v951 = vunpack.c.l.b16 %v927
    %v952 = vunpack.c.l.b16 %v928
    %v953 = vunpack.c.l.b16 %v929
    %v954 = vunpack.c.l.b16 %v930
    %v955 = vunpack.c.l.b16 %v931
    %v956 = vunpack.c.l.b16 %v932
    %v957 = vunpack.c.l.b16 %v933
    %v958 = vunpack.c.l.b16 %v934
    %v959 = vpack.c.b16 %v948, %v947
    %v960 = vpack.c.b16 %v950, %v949
    %v961 = vpack.c.b16 %v952, %v951
    %v962 = vpack.c.b16 %v954, %v953
    %v963 = vpack.c.b16 %v956, %v955
    %v964 = vpack.c.b16 %v958, %v957
    %v972 = vsel %vm233, %v918, 0
    %v975 = vsel %vm233, %v919, 0
    %v978 = vsel %vm233, %v920, 0
    %v981 = vsel %vm233, %v921, 0
    %983 = vmatpush.bf16.msra.mxu0 0
    %984 = vmatpush.bf16.msra.mxu0 0
    %985 = vmatpush.bf16.msra.mxu0 %v964
    %986 = vmatpush.bf16.msra.mxu0 %v963
    %987 = vmatpush.bf16.msra.mxu0 %v962
    %988 = vmatpush.bf16.msra.mxu0 %v961
    %989 = vmatpush.bf16.msra.mxu0 %v960
    %990 = vmatpush.bf16.msra.mxu0 %v959
    %991 = vmatmul.bf16.gmra.mxu0 %v972
    %v992 = vpop.f32.mrf.mxu0
    %v993 = vadd.f32 0.0, %v992
    %v994 = vpop.f32.mrf.mxu0
    %v995 = vadd.f32 0.0, %v994
    %996 = vmatmul.bf16.gmra.mxu0 %v975
    %v997 = vpop.f32.mrf.mxu0
    %v998 = vadd.f32 0.0, %v997
    %v999 = vpop.f32.mrf.mxu0
    %v1000 = vadd.f32 0.0, %v999
    %1001 = vmatmul.bf16.gmra.mxu0 %v978
    %v1002 = vpop.f32.mrf.mxu0
    %v1003 = vadd.f32 0.0, %v1002
    %v1004 = vpop.f32.mrf.mxu0
    %v1005 = vadd.f32 0.0, %v1004
    %1006 = vmatmul.bf16.gmra.mxu0 %v981
    %v1007 = vpop.f32.mrf.mxu0
    %v1008 = vadd.f32 0.0, %v1007
    %v1009 = vpop.f32.mrf.mxu0
    %v1010 = vadd.f32 0.0, %v1009
    %1011 = vdwg.mxu0
    %v1012 = vadd.f32 %v854, %v993
    %v1013 = vadd.f32 %v855, %v995
    %v1014 = vadd.f32 %v856, %v998
    %v1015 = vadd.f32 %v857, %v1000
    %v1016 = vadd.f32 %v858, %v1003
    %v1017 = vadd.f32 %v859, %v1005
    %v1018 = vadd.f32 %v860, %v1008
    %v1019 = vadd.f32 %v861, %v1010
    %vm1020 = vcmp.ge.s32.totalorder %v397, 4294967294
    %vm1021 = vcmp.ge.s32.totalorder %v398, 4294967294
    %vm1022 = vcmp.ge.s32.totalorder %v399, 4294967294
    %vm1023 = vcmp.ge.s32.totalorder %v400, 4294967294
    %vm1024 = vcmp.ge.s32.totalorder %v401, 4294967294
    %vm1025 = vcmp.ge.s32.totalorder %v402, 4294967294
    %vm1026 = vcmp.ge.s32.totalorder %v403, 4294967294
    %vm1027 = vcmp.ge.s32.totalorder %v404, 4294967294
    %vm1028 = vcmp.lt.s32.totalorder %v397, 6
    %vm1029 = vcmp.lt.s32.totalorder %v398, 6
    %vm1030 = vcmp.lt.s32.totalorder %v399, 6
    %vm1031 = vcmp.lt.s32.totalorder %v400, 6
    %vm1032 = vcmp.lt.s32.totalorder %v401, 6
    %vm1033 = vcmp.lt.s32.totalorder %v402, 6
    %vm1034 = vcmp.lt.s32.totalorder %v403, 6
    %vm1035 = vcmp.lt.s32.totalorder %v404, 6
    %vm1036 = vmand %vm1020, %vm1028
    %vm1037 = vmand %vm1021, %vm1029
    %vm1038 = vmand %vm1022, %vm1030
    %vm1039 = vmand %vm1023, %vm1031
    %vm1040 = vmand %vm1024, %vm1032
    %vm1041 = vmand %vm1025, %vm1033
    %vm1042 = vmand %vm1026, %vm1034
    %vm1043 = vmand %vm1027, %vm1035
    %v1044 = vld [vmem:[#allocation3 + $0x4] sm:$0xff]
    %v1045 = vld [vmem:[#allocation3 + $0xc] sm:$0xff]
    %v1046 = vld [vmem:[#allocation3 + $0x14] sm:$0xff]
    %v1047 = vld [vmem:[#allocation3 + $0x1c] sm:$0xff]
    %v1048 = vld [vmem:[#allocation3 + $0x24] sm:$0xff]
    %v1049 = vld [vmem:[#allocation3 + $0x2c] sm:$0xff]
    %v1050 = vld [vmem:[#allocation3 + $0x34] sm:$0xff]
    %v1051 = vld [vmem:[#allocation3 + $0x3c] sm:$0xff]
    %v1052 = vsel %vm1036, 1, 0
    %v1053 = vsel %vm1037, 1, 0
    %v1054 = vsel %vm1038, 1, 0
    %v1055 = vsel %vm1039, 1, 0
    %v1056 = vsel %vm1040, 1, 0
    %v1057 = vsel %vm1041, 1, 0
    %v1058 = vsel %vm1042, 1, 0
    %v1059 = vsel %vm1043, 1, 0
    %vm1060 = vcmp.eq.s32.totalorder %v1052, 1
    %vm1061 = vcmp.eq.s32.totalorder %v1053, 1
    %vm1062 = vcmp.eq.s32.totalorder %v1054, 1
    %vm1063 = vcmp.eq.s32.totalorder %v1055, 1
    %vm1064 = vcmp.eq.s32.totalorder %v1056, 1
    %vm1065 = vcmp.eq.s32.totalorder %v1057, 1
    %vm1066 = vcmp.eq.s32.totalorder %v1058, 1
    %vm1067 = vcmp.eq.s32.totalorder %v1059, 1
    %v1068 = vsel %vm1060, %v1044, 0.0
    %v1069 = vsel %vm1061, %v1045, 0.0
    %v1070 = vsel %vm1062, %v1046, 0.0
    %v1071 = vsel %vm1063, %v1047, 0.0
    %v1072 = vsel %vm1064, %v1048, 0.0
    %v1073 = vsel %vm1065, %v1049, 0.0
    %v1074 = vsel %vm1066, %v1050, 0.0
    %v1075 = vsel %vm1067, %v1051, 0.0
    %v1076 = vpack.c.bf16 %v1069, %v1068
    %v1077 = vpack.c.bf16 %v1071, %v1070
    %v1078 = vpack.c.bf16 %v1073, %v1072
    %v1079 = vpack.c.bf16 %v1075, %v1074
    %s1080 = scalar_lea.vmem %s4, 192
    %v1081 = vld [vmem:[%s1080] sm:$0xf]
    %v1082 = vld [vmem:[%s1080 + $0x4] sm:$0xf]
    %v1083 = vld [vmem:[%s1080 + $0x8] sm:$0xf]
    %v1084 = vld [vmem:[%s1080 + $0xc] sm:$0xf]
    %v1085 = vld [vmem:[%s1080 + $0x10] sm:$0xf]
    %v1086 = vld [vmem:[%s1080 + $0x14] sm:$0xf]
    %v1087 = vld [vmem:[%s1080 + $0x18] sm:$0xf]
    %v1088 = vld [vmem:[%s1080 + $0x1c] sm:$0xf]
    %v1089 = vld [vmem:[%s1080 + $0x20] sm:$0xf]
    %v1090 = vld [vmem:[%s1080 + $0x24] sm:$0xf]
    %v1091 = vld [vmem:[%s1080 + $0x28] sm:$0xf]
    %v1092 = vld [vmem:[%s1080 + $0x2c] sm:$0xf]
    %v1105 = vunpack.c.l.b16 %v1081
    %v1106 = vunpack.c.l.b16 %v1082
    %v1107 = vunpack.c.l.b16 %v1083
    %v1108 = vunpack.c.l.b16 %v1084
    %v1109 = vunpack.c.l.b16 %v1085
    %v1110 = vunpack.c.l.b16 %v1086
    %v1111 = vunpack.c.l.b16 %v1087
    %v1112 = vunpack.c.l.b16 %v1088
    %v1113 = vunpack.c.l.b16 %v1089
    %v1114 = vunpack.c.l.b16 %v1090
    %v1115 = vunpack.c.l.b16 %v1091
    %v1116 = vunpack.c.l.b16 %v1092
    %v1117 = vpack.c.b16 %v1106, %v1105
    %v1118 = vpack.c.b16 %v1108, %v1107
    %v1119 = vpack.c.b16 %v1110, %v1109
    %v1120 = vpack.c.b16 %v1112, %v1111
    %v1121 = vpack.c.b16 %v1114, %v1113
    %v1122 = vpack.c.b16 %v1116, %v1115
    %v1130 = vsel %vm233, %v1076, 0
    %v1133 = vsel %vm233, %v1077, 0
    %v1136 = vsel %vm233, %v1078, 0
    %v1139 = vsel %vm233, %v1079, 0
    %1141 = vmatpush.bf16.msra.mxu0 0
    %1142 = vmatpush.bf16.msra.mxu0 0
    %1143 = vmatpush.bf16.msra.mxu0 %v1122
    %1144 = vmatpush.bf16.msra.mxu0 %v1121
    %1145 = vmatpush.bf16.msra.mxu0 %v1120
    %1146 = vmatpush.bf16.msra.mxu0 %v1119
    %1147 = vmatpush.bf16.msra.mxu0 %v1118
    %1148 = vmatpush.bf16.msra.mxu0 %v1117
    %1149 = vmatmul.bf16.gmra.mxu0 %v1130
    %v1150 = vpop.f32.mrf.mxu0
    %v1151 = vadd.f32 0.0, %v1150
    %v1152 = vpop.f32.mrf.mxu0
    %v1153 = vadd.f32 0.0, %v1152
    %1154 = vmatmul.bf16.gmra.mxu0 %v1133
    %v1155 = vpop.f32.mrf.mxu0
    %v1156 = vadd.f32 0.0, %v1155
    %v1157 = vpop.f32.mrf.mxu0
    %v1158 = vadd.f32 0.0, %v1157
    %1159 = vmatmul.bf16.gmra.mxu0 %v1136
    %v1160 = vpop.f32.mrf.mxu0
    %v1161 = vadd.f32 0.0, %v1160
    %v1162 = vpop.f32.mrf.mxu0
    %v1163 = vadd.f32 0.0, %v1162
    %1164 = vmatmul.bf16.gmra.mxu0 %v1139
    %v1165 = vpop.f32.mrf.mxu0
    %v1166 = vadd.f32 0.0, %v1165
    %v1167 = vpop.f32.mrf.mxu0
    %v1168 = vadd.f32 0.0, %v1167
    %1169 = vdwg.mxu0
    %v1170 = vadd.f32 %v1012, %v1151
    %v1171 = vadd.f32 %v1013, %v1153
    %v1172 = vadd.f32 %v1014, %v1156
    %v1173 = vadd.f32 %v1015, %v1158
    %v1174 = vadd.f32 %v1016, %v1161
    %v1175 = vadd.f32 %v1017, %v1163
    %v1176 = vadd.f32 %v1018, %v1166
    %v1177 = vadd.f32 %v1019, %v1168
    %v1178 = vld [vmem:[%s5] sm:$0x1]
    %v1180 = vperm.slane %v1178, 0
    %v1182 = vmul.f32 %v1170, %v1180
    %v1183 = vmul.f32 %v1171, %v1180
    %v1184 = vmul.f32 %v1172, %v1180
    %v1185 = vmul.f32 %v1173, %v1180
    %v1186 = vmul.f32 %v1174, %v1180
    %v1187 = vmul.f32 %v1175, %v1180
    %v1188 = vmul.f32 %v1176, %v1180
    %v1189 = vmul.f32 %v1177, %v1180
    %v1190 = vld [vmem:[%s6] sm:$0x1]
    %v1192 = vperm.slane %v1190, 0
    %v1194 = vadd.f32 %v1182, %v1192
    %v1195 = vadd.f32 %v1183, %v1192
    %v1196 = vadd.f32 %v1184, %v1192
    %v1197 = vadd.f32 %v1185, %v1192
    %v1198 = vadd.f32 %v1186, %v1192
    %v1199 = vadd.f32 %v1187, %v1192
    %v1200 = vadd.f32 %v1188, %v1192
    %v1201 = vadd.f32 %v1189, %v1192
    %v1202 = vmax.f32 %v1194, 0.0
    %v1203 = vmax.f32 %v1195, 0.0
    %v1204 = vmax.f32 %v1196, 0.0
    %v1205 = vmax.f32 %v1197, 0.0
    %v1206 = vmax.f32 %v1198, 0.0
    %v1207 = vmax.f32 %v1199, 0.0
    %v1208 = vmax.f32 %v1200, 0.0
    %v1209 = vmax.f32 %v1201, 0.0
    %vm1210 = vcmask 441344
    %1211 = vst.msk [vmem:[#allocation4] sm:$0xff] %vm1210, %v1202
    %1212 = vst.msk [vmem:[#allocation4 + $0x8] sm:$0xff] %vm1210, %v1203
    %1213 = vst.msk [vmem:[#allocation4 + $0x10] sm:$0xff] %vm1210, %v1204
    %1214 = vst.msk [vmem:[#allocation4 + $0x18] sm:$0xff] %vm1210, %v1205
    %1215 = vst.msk [vmem:[#allocation4 + $0x20] sm:$0xff] %vm1210, %v1206
    %1216 = vst.msk [vmem:[#allocation4 + $0x28] sm:$0xff] %vm1210, %v1207
    %1217 = vst.msk [vmem:[#allocation4 + $0x30] sm:$0xff] %vm1210, %v1208
    %1218 = vst.msk [vmem:[#allocation4 + $0x38] sm:$0xff] %vm1210, %v1209
    %v1219 = vld [vmem:[#allocation4] ss:$8 sm:$0xf]
    %v1220 = vld [vmem:[#allocation4] ss:$8 sm:$0xf0]
    %v1221 = vor.u32 %v1219, %v1220
    %s1222 = scalar_lea.vmem [#allocation4], 1
    %v1223 = vld [vmem:[%s1222] ss:$8 sm:$0xf]
    %v1224 = vld [vmem:[%s1222] ss:$8 sm:$0xf0]
    %v1225 = vor.u32 %v1223, %v1224
    %v1226 = vmax.f32 %v1221, %v1225
    %v1227 = vpack.c.bf16 %v1226, %v1226
    %v1228 = vld [vmem:[%s7] sm:$0xff]
    %v1229 = vld [vmem:[%s7 + $0x8] sm:$0xff]
    %v1230 = vld [vmem:[%s7 + $0x10] sm:$0xff]
    %v1231 = vld [vmem:[%s7 + $0x18] sm:$0xff]
    %v1232 = vld [vmem:[%s7 + $0x20] sm:$0xff]
    %v1233 = vld [vmem:[%s7 + $0x28] sm:$0xff]
    %v1234 = vld [vmem:[%s7 + $0x30] sm:$0xff]
    %v1235 = vld [vmem:[%s7 + $0x38] sm:$0xff]
    %v1236 = vld [vmem:[%s7 + $0x40] sm:$0xff]
    %v1237 = vld [vmem:[%s7 + $0x48] sm:$0xff]
    %v1238 = vld [vmem:[%s7 + $0x50] sm:$0xff]
    %v1239 = vld [vmem:[%s7 + $0x58] sm:$0xff]
    %v1240 = vld [vmem:[%s7 + $0x60] sm:$0x77]
    %v1241 = vld [vmem:[%s7 + $0x68] sm:$0x77]
    %s1242 = scalar_lea.vmem [#allocation4], 2
    %v1243 = vld [vmem:[%s1242] ss:$8 sm:$0xf]
    %v1244 = vld [vmem:[%s1242] ss:$8 sm:$0xf0]
    %v1245 = vor.u32 %v1243, %v1244
    %s1246 = scalar_lea.vmem [#allocation4], 3
    %v1247 = vld [vmem:[%s1246] ss:$8 sm:$0xf]
    %v1248 = vld [vmem:[%s1246] ss:$8 sm:$0xf0]
    %v1249 = vor.u32 %v1247, %v1248
    %v1250 = vmax.f32 %v1245, %v1249
    %v1251 = vpack.c.bf16 %v1250, %v1250
    %s1252 = scalar_lea.vmem %s7, 112
    %v1253 = vld [vmem:[%s1252] sm:$0xff]
    %v1254 = vld [vmem:[%s1252 + $0x8] sm:$0xff]
    %v1255 = vld [vmem:[%s1252 + $0x10] sm:$0xff]
    %v1256 = vld [vmem:[%s1252 + $0x18] sm:$0xff]
    %v1257 = vld [vmem:[%s1252 + $0x20] sm:$0xff]
    %v1258 = vld [vmem:[%s1252 + $0x28] sm:$0xff]
    %v1259 = vld [vmem:[%s1252 + $0x30] sm:$0xff]
    %v1260 = vld [vmem:[%s1252 + $0x38] sm:$0xff]
    %v1261 = vld [vmem:[%s1252 + $0x40] sm:$0xff]
    %v1262 = vld [vmem:[%s1252 + $0x48] sm:$0xff]
    %v1263 = vld [vmem:[%s1252 + $0x50] sm:$0xff]
    %v1264 = vld [vmem:[%s1252 + $0x58] sm:$0xff]
    %v1265 = vld [vmem:[%s1252 + $0x60] sm:$0x77]
    %v1266 = vld [vmem:[%s1252 + $0x68] sm:$0x77]
    %v1281 = vunpack.c.l.b16 %v1253
    %v1282 = vunpack.c.h.b16 %v1253
    %v1283 = vunpack.c.l.b16 %v1254
    %v1284 = vunpack.c.h.b16 %v1254
    %v1285 = vunpack.c.l.b16 %v1255
    %v1286 = vunpack.c.h.b16 %v1255
    %v1287 = vunpack.c.l.b16 %v1256
    %v1288 = vunpack.c.h.b16 %v1256
    %v1289 = vunpack.c.l.b16 %v1257
    %v1290 = vunpack.c.h.b16 %v1257
    %v1291 = vunpack.c.l.b16 %v1258
    %v1292 = vunpack.c.h.b16 %v1258
    %v1293 = vunpack.c.l.b16 %v1259
    %v1294 = vunpack.c.h.b16 %v1259
    %v1295 = vunpack.c.l.b16 %v1260
    %v1296 = vunpack.c.h.b16 %v1260
    %v1297 = vunpack.c.l.b16 %v1261
    %v1298 = vunpack.c.h.b16 %v1261
    %v1299 = vunpack.c.l.b16 %v1262
    %v1300 = vunpack.c.h.b16 %v1262
    %v1301 = vunpack.c.l.b16 %v1263
    %v1302 = vunpack.c.h.b16 %v1263
    %v1303 = vunpack.c.l.b16 %v1264
    %v1304 = vunpack.c.h.b16 %v1264
    %v1305 = vunpack.c.l.b16 %v1265
    %v1306 = vunpack.c.h.b16 %v1265
    %v1307 = vunpack.c.l.b16 %v1266
    %v1308 = vunpack.c.h.b16 %v1266
    %v1309 = vpack.c.b16 %v1285, %v1281
    %v1310 = vpack.c.b16 %v1286, %v1282
    %v1311 = vpack.c.b16 %v1287, %v1283
    %v1312 = vpack.c.b16 %v1288, %v1284
    %v1313 = vpack.c.b16 %v1293, %v1289
    %v1314 = vpack.c.b16 %v1294, %v1290
    %v1315 = vpack.c.b16 %v1295, %v1291
    %v1316 = vpack.c.b16 %v1296, %v1292
    %v1317 = vpack.c.b16 %v1301, %v1297
    %v1318 = vpack.c.b16 %v1302, %v1298
    %v1319 = vpack.c.b16 %v1303, %v1299
    %v1320 = vpack.c.b16 %v1304, %v1300
    %v1321 = vpack.c.b16 %v1305, %v1305
    %v1322 = vpack.c.b16 %v1306, %v1306
    %v1323 = vpack.c.b16 %v1307, %v1307
    %v1324 = vpack.c.b16 %v1308, %v1308
    %v1338 = vsel %vm1210, %v1251, 0
    %vm1340 = vcmask 1042432
    %v1342 = vsel %vm1340, %v1321, 0
    %v1345 = vsel %vm1340, %v1322, 0
    %v1348 = vsel %vm1340, %v1323, 0
    %v1351 = vsel %vm1340, %v1324, 0
    %1353 = vmatpush.bf16.msra.mxu0 0
    %1354 = vmatpush.bf16.msra.mxu0 0
    %1355 = vmatpush.bf16.msra.mxu0 0
    %1356 = vmatpush.bf16.msra.mxu0 0
    %1357 = vmatpush.bf16.msra.mxu0 %v1342
    %1358 = vmatpush.bf16.msra.mxu0 %v1317
    %1359 = vmatpush.bf16.msra.mxu0 %v1313
    %1360 = vmatpush.bf16.msra.mxu0 %v1309
    %1361 = vmatmul.bf16.gmra.mxu0 %v1338
    %v1362 = vpop.f32.mrf.mxu0
    %v1363 = vadd.f32 0.0, %v1362
    %v1364 = vpop.f32.mrf.mxu0
    %1365 = vdwg.mxu0
    %1366 = vmatpush.bf16.msra.mxu0 0
    %1367 = vmatpush.bf16.msra.mxu0 0
    %1368 = vmatpush.bf16.msra.mxu0 0
    %1369 = vmatpush.bf16.msra.mxu0 0
    %1370 = vmatpush.bf16.msra.mxu0 %v1345
    %1371 = vmatpush.bf16.msra.mxu0 %v1318
    %1372 = vmatpush.bf16.msra.mxu0 %v1314
    %1373 = vmatpush.bf16.msra.mxu0 %v1310
    %1374 = vmatmul.bf16.gmra.mxu0 %v1338
    %v1375 = vpop.f32.mrf.mxu0
    %v1376 = vadd.f32 0.0, %v1375
    %v1377 = vpop.f32.mrf.mxu0
    %1378 = vdwg.mxu0
    %1379 = vmatpush.bf16.msra.mxu0 0
    %1380 = vmatpush.bf16.msra.mxu0 0
    %1381 = vmatpush.bf16.msra.mxu0 0
    %1382 = vmatpush.bf16.msra.mxu0 0
    %1383 = vmatpush.bf16.msra.mxu0 %v1348
    %1384 = vmatpush.bf16.msra.mxu0 %v1319
    %1385 = vmatpush.bf16.msra.mxu0 %v1315
    %1386 = vmatpush.bf16.msra.mxu0 %v1311
    %1387 = vmatmul.bf16.gmra.mxu0 %v1338
    %v1388 = vpop.f32.mrf.mxu0
    %v1389 = vadd.f32 0.0, %v1388
    %v1390 = vpop.f32.mrf.mxu0
    %1391 = vdwg.mxu0
    %1392 = vmatpush.bf16.msra.mxu0 0
    %1393 = vmatpush.bf16.msra.mxu0 0
    %1394 = vmatpush.bf16.msra.mxu0 0
    %1395 = vmatpush.bf16.msra.mxu0 0
    %1396 = vmatpush.bf16.msra.mxu0 %v1351
    %1397 = vmatpush.bf16.msra.mxu0 %v1320
    %1398 = vmatpush.bf16.msra.mxu0 %v1316
    %1399 = vmatpush.bf16.msra.mxu0 %v1312
    %1400 = vmatmul.bf16.gmra.mxu0 %v1338
    %v1401 = vpop.f32.mrf.mxu0
    %v1402 = vadd.f32 0.0, %v1401
    %v1403 = vpop.f32.mrf.mxu0
    %1404 = vdwg.mxu0
    %v1419 = vunpack.c.l.b16 %v1228
    %v1420 = vunpack.c.h.b16 %v1228
    %v1421 = vunpack.c.l.b16 %v1229
    %v1422 = vunpack.c.h.b16 %v1229
    %v1423 = vunpack.c.l.b16 %v1230
    %v1424 = vunpack.c.h.b16 %v1230
    %v1425 = vunpack.c.l.b16 %v1231
    %v1426 = vunpack.c.h.b16 %v1231
    %v1427 = vunpack.c.l.b16 %v1232
    %v1428 = vunpack.c.h.b16 %v1232
    %v1429 = vunpack.c.l.b16 %v1233
    %v1430 = vunpack.c.h.b16 %v1233
    %v1431 = vunpack.c.l.b16 %v1234
    %v1432 = vunpack.c.h.b16 %v1234
    %v1433 = vunpack.c.l.b16 %v1235
    %v1434 = vunpack.c.h.b16 %v1235
    %v1435 = vunpack.c.l.b16 %v1236
    %v1436 = vunpack.c.h.b16 %v1236
    %v1437 = vunpack.c.l.b16 %v1237
    %v1438 = vunpack.c.h.b16 %v1237
    %v1439 = vunpack.c.l.b16 %v1238
    %v1440 = vunpack.c.h.b16 %v1238
    %v1441 = vunpack.c.l.b16 %v1239
    %v1442 = vunpack.c.h.b16 %v1239
    %v1443 = vunpack.c.l.b16 %v1240
    %v1444 = vunpack.c.h.b16 %v1240
    %v1445 = vunpack.c.l.b16 %v1241
    %v1446 = vunpack.c.h.b16 %v1241
    %v1447 = vpack.c.b16 %v1423, %v1419
    %v1448 = vpack.c.b16 %v1424, %v1420
    %v1449 = vpack.c.b16 %v1425, %v1421
    %v1450 = vpack.c.b16 %v1426, %v1422
    %v1451 = vpack.c.b16 %v1431, %v1427
    %v1452 = vpack.c.b16 %v1432, %v1428
    %v1453 = vpack.c.b16 %v1433, %v1429
    %v1454 = vpack.c.b16 %v1434, %v1430
    %v1455 = vpack.c.b16 %v1439, %v1435
    %v1456 = vpack.c.b16 %v1440, %v1436
    %v1457 = vpack.c.b16 %v1441, %v1437
    %v1458 = vpack.c.b16 %v1442, %v1438
    %v1459 = vpack.c.b16 %v1443, %v1443
    %v1460 = vpack.c.b16 %v1444, %v1444
    %v1461 = vpack.c.b16 %v1445, %v1445
    %v1462 = vpack.c.b16 %v1446, %v1446
    %v1476 = vsel %vm1210, %v1227, 0
    %v1479 = vsel %vm1340, %v1459, 0
    %v1482 = vsel %vm1340, %v1460, 0
    %v1485 = vsel %vm1340, %v1461, 0
    %v1488 = vsel %vm1340, %v1462, 0
    %1490 = vmatpush.bf16.msra.mxu0 0
    %1491 = vmatpush.bf16.msra.mxu0 0
    %1492 = vmatpush.bf16.msra.mxu0 0
    %1493 = vmatpush.bf16.msra.mxu0 0
    %1494 = vmatpush.bf16.msra.mxu0 %v1479
    %1495 = vmatpush.bf16.msra.mxu0 %v1455
    %1496 = vmatpush.bf16.msra.mxu0 %v1451
    %1497 = vmatpush.bf16.msra.mxu0 %v1447
    %1498 = vmatmul.bf16.gmra.mxu0 %v1476
    %v1499 = vpop.f32.mrf.mxu0
    %v1500 = vadd.f32 %v1363, %v1499
    %v1501 = vpop.f32.mrf.mxu0
    %1502 = vdwg.mxu0
    %1503 = vmatpush.bf16.msra.mxu0 0
    %1504 = vmatpush.bf16.msra.mxu0 0
    %1505 = vmatpush.bf16.msra.mxu0 0
    %1506 = vmatpush.bf16.msra.mxu0 0
    %1507 = vmatpush.bf16.msra.mxu0 %v1482
    %1508 = vmatpush.bf16.msra.mxu0 %v1456
    %1509 = vmatpush.bf16.msra.mxu0 %v1452
    %1510 = vmatpush.bf16.msra.mxu0 %v1448
    %1511 = vmatmul.bf16.gmra.mxu0 %v1476
    %v1512 = vpop.f32.mrf.mxu0
    %v1513 = vadd.f32 %v1376, %v1512
    %v1514 = vpop.f32.mrf.mxu0
    %1515 = vdwg.mxu0
    %1516 = vmatpush.bf16.msra.mxu0 0
    %1517 = vmatpush.bf16.msra.mxu0 0
    %1518 = vmatpush.bf16.msra.mxu0 0
    %1519 = vmatpush.bf16.msra.mxu0 0
    %1520 = vmatpush.bf16.msra.mxu0 %v1485
    %1521 = vmatpush.bf16.msra.mxu0 %v1457
    %1522 = vmatpush.bf16.msra.mxu0 %v1453
    %1523 = vmatpush.bf16.msra.mxu0 %v1449
    %1524 = vmatmul.bf16.gmra.mxu0 %v1476
    %v1525 = vpop.f32.mrf.mxu0
    %v1526 = vadd.f32 %v1389, %v1525
    %v1527 = vpop.f32.mrf.mxu0
    %1528 = vdwg.mxu0
    %1529 = vmatpush.bf16.msra.mxu0 0
    %1530 = vmatpush.bf16.msra.mxu0 0
    %1531 = vmatpush.bf16.msra.mxu0 0
    %1532 = vmatpush.bf16.msra.mxu0 0
    %1533 = vmatpush.bf16.msra.mxu0 %v1488
    %1534 = vmatpush.bf16.msra.mxu0 %v1458
    %1535 = vmatpush.bf16.msra.mxu0 %v1454
    %1536 = vmatpush.bf16.msra.mxu0 %v1450
    %1537 = vmatmul.bf16.gmra.mxu0 %v1476
    %v1538 = vpop.f32.mrf.mxu0
    %v1539 = vadd.f32 %v1402, %v1538
    %v1540 = vpop.f32.mrf.mxu0
    %1541 = vdwg.mxu0
    %s1542 = scalar_lea.vmem [#allocation4], 4
    %v1543 = vld [vmem:[%s1542] ss:$8 sm:$0xf]
    %v1544 = vld [vmem:[%s1542] ss:$8 sm:$0xf0]
    %v1545 = vor.u32 %v1543, %v1544
    %s1546 = scalar_lea.vmem [#allocation4], 5
    %v1547 = vld [vmem:[%s1546] ss:$8 sm:$0xf]
    %v1548 = vld [vmem:[%s1546] ss:$8 sm:$0xf0]
    %v1549 = vor.u32 %v1547, %v1548
    %v1550 = vmax.f32 %v1545, %v1549
    %v1551 = vpack.c.bf16 %v1550, %v1550
    %s1552 = scalar_lea.vmem %s7, 224
    %v1553 = vld [vmem:[%s1552] sm:$0xff]
    %v1554 = vld [vmem:[%s1552 + $0x8] sm:$0xff]
    %v1555 = vld [vmem:[%s1552 + $0x10] sm:$0xff]
    %v1556 = vld [vmem:[%s1552 + $0x18] sm:$0xff]
    %v1557 = vld [vmem:[%s1552 + $0x20] sm:$0xff]
    %v1558 = vld [vmem:[%s1552 + $0x28] sm:$0xff]
    %v1559 = vld [vmem:[%s1552 + $0x30] sm:$0xff]
    %v1560 = vld [vmem:[%s1552 + $0x38] sm:$0xff]
    %v1561 = vld [vmem:[%s1552 + $0x40] sm:$0xff]
    %v1562 = vld [vmem:[%s1552 + $0x48] sm:$0xff]
    %v1563 = vld [vmem:[%s1552 + $0x50] sm:$0xff]
    %v1564 = vld [vmem:[%s1552 + $0x58] sm:$0xff]
    %v1565 = vld [vmem:[%s1552 + $0x60] sm:$0x77]
    %v1566 = vld [vmem:[%s1552 + $0x68] sm:$0x77]
    %v1581 = vunpack.c.l.b16 %v1553
    %v1582 = vunpack.c.h.b16 %v1553
    %v1583 = vunpack.c.l.b16 %v1554
    %v1584 = vunpack.c.h.b16 %v1554
    %v1585 = vunpack.c.l.b16 %v1555
    %v1586 = vunpack.c.h.b16 %v1555
    %v1587 = vunpack.c.l.b16 %v1556
    %v1588 = vunpack.c.h.b16 %v1556
    %v1589 = vunpack.c.l.b16 %v1557
    %v1590 = vunpack.c.h.b16 %v1557
    %v1591 = vunpack.c.l.b16 %v1558
    %v1592 = vunpack.c.h.b16 %v1558
    %v1593 = vunpack.c.l.b16 %v1559
    %v1594 = vunpack.c.h.b16 %v1559
    %v1595 = vunpack.c.l.b16 %v1560
    %v1596 = vunpack.c.h.b16 %v1560
    %v1597 = vunpack.c.l.b16 %v1561
    %v1598 = vunpack.c.h.b16 %v1561
    %v1599 = vunpack.c.l.b16 %v1562
    %v1600 = vunpack.c.h.b16 %v1562
    %v1601 = vunpack.c.l.b16 %v1563
    %v1602 = vunpack.c.h.b16 %v1563
    %v1603 = vunpack.c.l.b16 %v1564
    %v1604 = vunpack.c.h.b16 %v1564
    %v1605 = vunpack.c.l.b16 %v1565
    %v1606 = vunpack.c.h.b16 %v1565
    %v1607 = vunpack.c.l.b16 %v1566
    %v1608 = vunpack.c.h.b16 %v1566
    %v1609 = vpack.c.b16 %v1585, %v1581
    %v1610 = vpack.c.b16 %v1586, %v1582
    %v1611 = vpack.c.b16 %v1587, %v1583
    %v1612 = vpack.c.b16 %v1588, %v1584
    %v1613 = vpack.c.b16 %v1593, %v1589
    %v1614 = vpack.c.b16 %v1594, %v1590
    %v1615 = vpack.c.b16 %v1595, %v1591
    %v1616 = vpack.c.b16 %v1596, %v1592
    %v1617 = vpack.c.b16 %v1601, %v1597
    %v1618 = vpack.c.b16 %v1602, %v1598
    %v1619 = vpack.c.b16 %v1603, %v1599
    %v1620 = vpack.c.b16 %v1604, %v1600
    %v1621 = vpack.c.b16 %v1605, %v1605
    %v1622 = vpack.c.b16 %v1606, %v1606
    %v1623 = vpack.c.b16 %v1607, %v1607
    %v1624 = vpack.c.b16 %v1608, %v1608
    %v1638 = vsel %vm1210, %v1551, 0
    %v1641 = vsel %vm1340, %v1621, 0
    %v1644 = vsel %vm1340, %v1622, 0
    %v1647 = vsel %vm1340, %v1623, 0
    %v1650 = vsel %vm1340, %v1624, 0
    %1652 = vmatpush.bf16.msra.mxu0 0
    %1653 = vmatpush.bf16.msra.mxu0 0
    %1654 = vmatpush.bf16.msra.mxu0 0
    %1655 = vmatpush.bf16.msra.mxu0 0
    %1656 = vmatpush.bf16.msra.mxu0 %v1641
    %1657 = vmatpush.bf16.msra.mxu0 %v1617
    %1658 = vmatpush.bf16.msra.mxu0 %v1613
    %1659 = vmatpush.bf16.msra.mxu0 %v1609
    %1660 = vmatmul.bf16.gmra.mxu0 %v1638
    %v1661 = vpop.f32.mrf.mxu0
    %v1662 = vadd.f32 0.0, %v1661
    %v1663 = vpop.f32.mrf.mxu0
    %1664 = vdwg.mxu0
    %1665 = vmatpush.bf16.msra.mxu0 0
    %1666 = vmatpush.bf16.msra.mxu0 0
    %1667 = vmatpush.bf16.msra.mxu0 0
    %1668 = vmatpush.bf16.msra.mxu0 0
    %1669 = vmatpush.bf16.msra.mxu0 %v1644
    %1670 = vmatpush.bf16.msra.mxu0 %v1618
    %1671 = vmatpush.bf16.msra.mxu0 %v1614
    %1672 = vmatpush.bf16.msra.mxu0 %v1610
    %1673 = vmatmul.bf16.gmra.mxu0 %v1638
    %v1674 = vpop.f32.mrf.mxu0
    %v1675 = vadd.f32 0.0, %v1674
    %v1676 = vpop.f32.mrf.mxu0
    %1677 = vdwg.mxu0
    %1678 = vmatpush.bf16.msra.mxu0 0
    %1679 = vmatpush.bf16.msra.mxu0 0
    %1680 = vmatpush.bf16.msra.mxu0 0
    %1681 = vmatpush.bf16.msra.mxu0 0
    %1682 = vmatpush.bf16.msra.mxu0 %v1647
    %1683 = vmatpush.bf16.msra.mxu0 %v1619
    %1684 = vmatpush.bf16.msra.mxu0 %v1615
    %1685 = vmatpush.bf16.msra.mxu0 %v1611
    %1686 = vmatmul.bf16.gmra.mxu0 %v1638
    %v1687 = vpop.f32.mrf.mxu0
    %v1688 = vadd.f32 0.0, %v1687
    %v1689 = vpop.f32.mrf.mxu0
    %1690 = vdwg.mxu0
    %1691 = vmatpush.bf16.msra.mxu0 0
    %1692 = vmatpush.bf16.msra.mxu0 0
    %1693 = vmatpush.bf16.msra.mxu0 0
    %1694 = vmatpush.bf16.msra.mxu0 0
    %1695 = vmatpush.bf16.msra.mxu0 %v1650
    %1696 = vmatpush.bf16.msra.mxu0 %v1620
    %1697 = vmatpush.bf16.msra.mxu0 %v1616
    %1698 = vmatpush.bf16.msra.mxu0 %v1612
    %1699 = vmatmul.bf16.gmra.mxu0 %v1638
    %v1700 = vpop.f32.mrf.mxu0
    %v1701 = vadd.f32 0.0, %v1700
    %v1702 = vpop.f32.mrf.mxu0
    %1703 = vdwg.mxu0
    %v1704 = vadd.f32 %v1500, %v1662
    %v1705 = vadd.f32 %v1513, %v1675
    %v1706 = vadd.f32 %v1526, %v1688
    %v1707 = vadd.f32 %v1539, %v1701
    %s1708 = scalar_lea.vmem [#allocation4], 6
    %v1709 = vld [vmem:[%s1708] ss:$8 sm:$0xf]
    %v1710 = vld [vmem:[%s1708] ss:$8 sm:$0xf0]
    %v1711 = vor.u32 %v1709, %v1710
    %s1712 = scalar_lea.vmem [#allocation4], 7
    %v1713 = vld [vmem:[%s1712] ss:$8 sm:$0xf]
    %v1714 = vld [vmem:[%s1712] ss:$8 sm:$0xf0]
    %v1715 = vor.u32 %v1713, %v1714
    %v1716 = vmax.f32 %v1711, %v1715
    %v1717 = vpack.c.bf16 %v1716, %v1716
    %s1718 = scalar_lea.vmem %s7, 336
    %v1719 = vld [vmem:[%s1718] sm:$0xff]
    %v1720 = vld [vmem:[%s1718 + $0x8] sm:$0xff]
    %v1721 = vld [vmem:[%s1718 + $0x10] sm:$0xff]
    %v1722 = vld [vmem:[%s1718 + $0x18] sm:$0xff]
    %v1723 = vld [vmem:[%s1718 + $0x20] sm:$0xff]
    %v1724 = vld [vmem:[%s1718 + $0x28] sm:$0xff]
    %v1725 = vld [vmem:[%s1718 + $0x30] sm:$0xff]
    %v1726 = vld [vmem:[%s1718 + $0x38] sm:$0xff]
    %v1727 = vld [vmem:[%s1718 + $0x40] sm:$0xff]
    %v1728 = vld [vmem:[%s1718 + $0x48] sm:$0xff]
    %v1729 = vld [vmem:[%s1718 + $0x50] sm:$0xff]
    %v1730 = vld [vmem:[%s1718 + $0x58] sm:$0xff]
    %v1731 = vld [vmem:[%s1718 + $0x60] sm:$0x77]
    %v1732 = vld [vmem:[%s1718 + $0x68] sm:$0x77]
    %v1747 = vunpack.c.l.b16 %v1719
    %v1748 = vunpack.c.h.b16 %v1719
    %v1749 = vunpack.c.l.b16 %v1720
    %v1750 = vunpack.c.h.b16 %v1720
    %v1751 = vunpack.c.l.b16 %v1721
    %v1752 = vunpack.c.h.b16 %v1721
    %v1753 = vunpack.c.l.b16 %v1722
    %v1754 = vunpack.c.h.b16 %v1722
    %v1755 = vunpack.c.l.b16 %v1723
    %v1756 = vunpack.c.h.b16 %v1723
    %v1757 = vunpack.c.l.b16 %v1724
    %v1758 = vunpack.c.h.b16 %v1724
    %v1759 = vunpack.c.l.b16 %v1725
    %v1760 = vunpack.c.h.b16 %v1725
    %v1761 = vunpack.c.l.b16 %v1726
    %v1762 = vunpack.c.h.b16 %v1726
    %v1763 = vunpack.c.l.b16 %v1727
    %v1764 = vunpack.c.h.b16 %v1727
    %v1765 = vunpack.c.l.b16 %v1728
    %v1766 = vunpack.c.h.b16 %v1728
    %v1767 = vunpack.c.l.b16 %v1729
    %v1768 = vunpack.c.h.b16 %v1729
    %v1769 = vunpack.c.l.b16 %v1730
    %v1770 = vunpack.c.h.b16 %v1730
    %v1771 = vunpack.c.l.b16 %v1731
    %v1772 = vunpack.c.h.b16 %v1731
    %v1773 = vunpack.c.l.b16 %v1732
    %v1774 = vunpack.c.h.b16 %v1732
    %v1775 = vpack.c.b16 %v1751, %v1747
    %v1776 = vpack.c.b16 %v1752, %v1748
    %v1777 = vpack.c.b16 %v1753, %v1749
    %v1778 = vpack.c.b16 %v1754, %v1750
    %v1779 = vpack.c.b16 %v1759, %v1755
    %v1780 = vpack.c.b16 %v1760, %v1756
    %v1781 = vpack.c.b16 %v1761, %v1757
    %v1782 = vpack.c.b16 %v1762, %v1758
    %v1783 = vpack.c.b16 %v1767, %v1763
    %v1784 = vpack.c.b16 %v1768, %v1764
    %v1785 = vpack.c.b16 %v1769, %v1765
    %v1786 = vpack.c.b16 %v1770, %v1766
    %v1787 = vpack.c.b16 %v1771, %v1771
    %v1788 = vpack.c.b16 %v1772, %v1772
    %v1789 = vpack.c.b16 %v1773, %v1773
    %v1790 = vpack.c.b16 %v1774, %v1774
    %v1804 = vsel %vm1210, %v1717, 0
    %v1807 = vsel %vm1340, %v1787, 0
    %v1810 = vsel %vm1340, %v1788, 0
    %v1813 = vsel %vm1340, %v1789, 0
    %v1816 = vsel %vm1340, %v1790, 0
    %1818 = vmatpush.bf16.msra.mxu0 0
    %1819 = vmatpush.bf16.msra.mxu0 0
    %1820 = vmatpush.bf16.msra.mxu0 0
    %1821 = vmatpush.bf16.msra.mxu0 0
    %1822 = vmatpush.bf16.msra.mxu0 %v1807
    %1823 = vmatpush.bf16.msra.mxu0 %v1783
    %1824 = vmatpush.bf16.msra.mxu0 %v1779
    %1825 = vmatpush.bf16.msra.mxu0 %v1775
    %1826 = vmatmul.bf16.gmra.mxu0 %v1804
    %v1827 = vpop.f32.mrf.mxu0
    %v1828 = vadd.f32 0.0, %v1827
    %v1829 = vpop.f32.mrf.mxu0
    %1830 = vdwg.mxu0
    %1831 = vmatpush.bf16.msra.mxu0 0
    %1832 = vmatpush.bf16.msra.mxu0 0
    %1833 = vmatpush.bf16.msra.mxu0 0
    %1834 = vmatpush.bf16.msra.mxu0 0
    %1835 = vmatpush.bf16.msra.mxu0 %v1810
    %1836 = vmatpush.bf16.msra.mxu0 %v1784
    %1837 = vmatpush.bf16.msra.mxu0 %v1780
    %1838 = vmatpush.bf16.msra.mxu0 %v1776
    %1839 = vmatmul.bf16.gmra.mxu0 %v1804
    %v1840 = vpop.f32.mrf.mxu0
    %v1841 = vadd.f32 0.0, %v1840
    %v1842 = vpop.f32.mrf.mxu0
    %1843 = vdwg.mxu0
    %1844 = vmatpush.bf16.msra.mxu0 0
    %1845 = vmatpush.bf16.msra.mxu0 0
    %1846 = vmatpush.bf16.msra.mxu0 0
    %1847 = vmatpush.bf16.msra.mxu0 0
    %1848 = vmatpush.bf16.msra.mxu0 %v1813
    %1849 = vmatpush.bf16.msra.mxu0 %v1785
    %1850 = vmatpush.bf16.msra.mxu0 %v1781
    %1851 = vmatpush.bf16.msra.mxu0 %v1777
    %1852 = vmatmul.bf16.gmra.mxu0 %v1804
    %v1853 = vpop.f32.mrf.mxu0
    %v1854 = vadd.f32 0.0, %v1853
    %v1855 = vpop.f32.mrf.mxu0
    %1856 = vdwg.mxu0
    %1857 = vmatpush.bf16.msra.mxu0 0
    %1858 = vmatpush.bf16.msra.mxu0 0
    %1859 = vmatpush.bf16.msra.mxu0 0
    %1860 = vmatpush.bf16.msra.mxu0 0
    %1861 = vmatpush.bf16.msra.mxu0 %v1816
    %1862 = vmatpush.bf16.msra.mxu0 %v1786
    %1863 = vmatpush.bf16.msra.mxu0 %v1782
    %1864 = vmatpush.bf16.msra.mxu0 %v1778
    %1865 = vmatmul.bf16.gmra.mxu0 %v1804
    %v1866 = vpop.f32.mrf.mxu0
    %v1867 = vadd.f32 0.0, %v1866
    %v1868 = vpop.f32.mrf.mxu0
    %1869 = vdwg.mxu0
    %v1870 = vadd.f32 %v1704, %v1828
    %v1871 = vadd.f32 %v1705, %v1841
    %v1872 = vadd.f32 %v1706, %v1854
    %v1873 = vadd.f32 %v1707, %v1867
    %v1874 = vld [vmem:[%s8] sm:$0xf]
    %v1876 = vperm.slane %v1874, 0
    %v1877 = vperm.slane %v1874, 1
    %v1878 = vperm.slane %v1874, 2
    %v1879 = vperm.slane %v1874, 3
    %v1884 = vadd.f32 %v1870, %v1876
    %v1885 = vadd.f32 %v1871, %v1877
    %v1886 = vadd.f32 %v1872, %v1878
    %v1887 = vadd.f32 %v1873, %v1879
    %v1888 = vmax.f32 %v1884, 0.0
    %v1889 = vmax.f32 %v1885, 0.0
    %v1890 = vmax.f32 %v1886, 0.0
    %v1891 = vmax.f32 %v1887, 0.0
    %v1892 = vpack.c.bf16 %v1888, %v1888
    %v1893 = vpack.c.bf16 %v1889, %v1889
    %v1894 = vpack.c.bf16 %v1890, %v1890
    %v1895 = vpack.c.bf16 %v1891, %v1891
    %v1896 = vld [vmem:[%s9] sm:$0xf]
    %v1897 = vld [vmem:[%s9 + $0x4] sm:$0xf]
    %v1898 = vld [vmem:[%s9 + $0x8] sm:$0xf]
    %v1899 = vld [vmem:[%s9 + $0xc] sm:$0xf]
    %v1900 = vld [vmem:[%s9 + $0x10] sm:$0xf]
    %v1901 = vld [vmem:[%s9 + $0x14] sm:$0xf]
    %v1902 = vld [vmem:[%s9 + $0x18] sm:$0xf]
    %v1903 = vld [vmem:[%s9 + $0x1c] sm:$0xf]
    %v1904 = vld [vmem:[%s9 + $0x20] sm:$0xf]
    %v1905 = vld [vmem:[%s9 + $0x24] sm:$0xf]
    %v1906 = vld [vmem:[%s9 + $0x28] sm:$0xf]
    %v1907 = vld [vmem:[%s9 + $0x2c] sm:$0xf]
    %v1908 = vld [vmem:[%s9 + $0x30] sm:$0xf]
    %v1909 = vld [vmem:[%s9 + $0x34] sm:$0xf]
    %v1910 = vld [vmem:[%s9 + $0x38] sm:$0xf]
    %v1911 = vld [vmem:[%s9 + $0x3c] sm:$0xf]
    %v1912 = vld [vmem:[%s9 + $0x40] sm:$0xf]
    %v1913 = vld [vmem:[%s9 + $0x44] sm:$0xf]
    %v1914 = vld [vmem:[%s9 + $0x48] sm:$0xf]
    %v1915 = vld [vmem:[%s9 + $0x4c] sm:$0xf]
    %v1916 = vld [vmem:[%s9 + $0x50] sm:$0xf]
    %v1917 = vld [vmem:[%s9 + $0x54] sm:$0xf]
    %v1918 = vld [vmem:[%s9 + $0x58] sm:$0xf]
    %v1919 = vld [vmem:[%s9 + $0x5c] sm:$0xf]
    %v1920 = vld [vmem:[%s9 + $0x60] sm:$0xf]
    %v1921 = vld [vmem:[%s9 + $0x64] sm:$0xf]
    %v1922 = vld [vmem:[%s9 + $0x68] sm:$0xf]
    %v1923 = vld [vmem:[%s9 + $0x6c] sm:$0xf]
    %v1924 = vld [vmem:[%s9 + $0x70] sm:$0xf]
    %v1925 = vld [vmem:[%s9 + $0x74] sm:$0xf]
    %v1926 = vld [vmem:[%s9 + $0x78] sm:$0xf]
    %v1927 = vld [vmem:[%s9 + $0x7c] sm:$0xf]
    %v1928 = vld [vmem:[%s9 + $0x80] sm:$0xf]
    %v1929 = vld [vmem:[%s9 + $0x84] sm:$0xf]
    %v1930 = vld [vmem:[%s9 + $0x88] sm:$0xf]
    %v1931 = vld [vmem:[%s9 + $0x8c] sm:$0xf]
    %v1932 = vld [vmem:[%s9 + $0x90] sm:$0xf]
    %v1933 = vld [vmem:[%s9 + $0x94] sm:$0xf]
    %v1934 = vld [vmem:[%s9 + $0x98] sm:$0xf]
    %v1935 = vld [vmem:[%s9 + $0x9c] sm:$0xf]
    %v1936 = vld [vmem:[%s9 + $0xa0] sm:$0xf]
    %v1937 = vld [vmem:[%s9 + $0xa4] sm:$0xf]
    %v1938 = vld [vmem:[%s9 + $0xa8] sm:$0xf]
    %v1939 = vld [vmem:[%s9 + $0xac] sm:$0xf]
    %v1940 = vld [vmem:[%s9 + $0xb0] sm:$0xf]
    %v1941 = vld [vmem:[%s9 + $0xb4] sm:$0xf]
    %v1942 = vld [vmem:[%s9 + $0xb8] sm:$0xf]
    %v1943 = vld [vmem:[%s9 + $0xbc] sm:$0xf]
    %v1944 = vld [vmem:[%s9 + $0xc0] sm:$0xf]
    %v1945 = vld [vmem:[%s9 + $0xc4] sm:$0xf]
    %v1946 = vld [vmem:[%s9 + $0xc8] sm:$0xf]
    %v1947 = vld [vmem:[%s9 + $0xcc] sm:$0xf]
    %v1948 = vld [vmem:[%s9 + $0xd0] sm:$0xf]
    %v1949 = vld [vmem:[%s9 + $0xd4] sm:$0xf]
    %v1950 = vld [vmem:[%s9 + $0xd8] sm:$0xf]
    %v1951 = vld [vmem:[%s9 + $0xdc] sm:$0xf]
    %v1952 = vld [vmem:[%s9 + $0xe0] sm:$0xf]
    %v1953 = vld [vmem:[%s9 + $0xe4] sm:$0xf]
    %v1954 = vld [vmem:[%s9 + $0xe8] sm:$0xf]
    %v1955 = vld [vmem:[%s9 + $0xec] sm:$0xf]
    %v1956 = vld [vmem:[%s9 + $0xf0] sm:$0xf]
    %v1957 = vld [vmem:[%s9 + $0xf4] sm:$0xf]
    %v1958 = vld [vmem:[%s9 + $0xf8] sm:$0xf]
    %v1959 = vld [vmem:[%s9 + $0xfc] sm:$0xf]
    %v1960 = vld [vmem:[%s10] sm:$0x1]
    %v1962 = vperm.slane %v1960, 0
    %v2028 = vunpack.c.l.b16 %v1896
    %v2029 = vunpack.c.l.b16 %v1897
    %v2030 = vunpack.c.l.b16 %v1898
    %v2031 = vunpack.c.l.b16 %v1899
    %v2032 = vunpack.c.l.b16 %v1900
    %v2033 = vunpack.c.l.b16 %v1901
    %v2034 = vunpack.c.l.b16 %v1902
    %v2035 = vunpack.c.l.b16 %v1903
    %v2036 = vunpack.c.l.b16 %v1904
    %v2037 = vunpack.c.l.b16 %v1905
    %v2038 = vunpack.c.l.b16 %v1906
    %v2039 = vunpack.c.l.b16 %v1907
    %v2040 = vunpack.c.l.b16 %v1908
    %v2041 = vunpack.c.l.b16 %v1909
    %v2042 = vunpack.c.l.b16 %v1910
    %v2043 = vunpack.c.l.b16 %v1911
    %v2044 = vunpack.c.l.b16 %v1912
    %v2045 = vunpack.c.l.b16 %v1913
    %v2046 = vunpack.c.l.b16 %v1914
    %v2047 = vunpack.c.l.b16 %v1915
    %v2048 = vunpack.c.l.b16 %v1916
    %v2049 = vunpack.c.l.b16 %v1917
    %v2050 = vunpack.c.l.b16 %v1918
    %v2051 = vunpack.c.l.b16 %v1919
    %v2052 = vunpack.c.l.b16 %v1920
    %v2053 = vunpack.c.l.b16 %v1921
    %v2054 = vunpack.c.l.b16 %v1922
    %v2055 = vunpack.c.l.b16 %v1923
    %v2056 = vunpack.c.l.b16 %v1924
    %v2057 = vunpack.c.l.b16 %v1925
    %v2058 = vunpack.c.l.b16 %v1926
    %v2059 = vunpack.c.l.b16 %v1927
    %v2060 = vunpack.c.l.b16 %v1928
    %v2061 = vunpack.c.l.b16 %v1929
    %v2062 = vunpack.c.l.b16 %v1930
    %v2063 = vunpack.c.l.b16 %v1931
    %v2064 = vunpack.c.l.b16 %v1932
    %v2065 = vunpack.c.l.b16 %v1933
    %v2066 = vunpack.c.l.b16 %v1934
    %v2067 = vunpack.c.l.b16 %v1935
    %v2068 = vunpack.c.l.b16 %v1936
    %v2069 = vunpack.c.l.b16 %v1937
    %v2070 = vunpack.c.l.b16 %v1938
    %v2071 = vunpack.c.l.b16 %v1939
    %v2072 = vunpack.c.l.b16 %v1940
    %v2073 = vunpack.c.l.b16 %v1941
    %v2074 = vunpack.c.l.b16 %v1942
    %v2075 = vunpack.c.l.b16 %v1943
    %v2076 = vunpack.c.l.b16 %v1944
    %v2077 = vunpack.c.l.b16 %v1945
    %v2078 = vunpack.c.l.b16 %v1946
    %v2079 = vunpack.c.l.b16 %v1947
    %v2080 = vunpack.c.l.b16 %v1948
    %v2081 = vunpack.c.l.b16 %v1949
    %v2082 = vunpack.c.l.b16 %v1950
    %v2083 = vunpack.c.l.b16 %v1951
    %v2084 = vunpack.c.l.b16 %v1952
    %v2085 = vunpack.c.l.b16 %v1953
    %v2086 = vunpack.c.l.b16 %v1954
    %v2087 = vunpack.c.l.b16 %v1955
    %v2088 = vunpack.c.l.b16 %v1956
    %v2089 = vunpack.c.l.b16 %v1957
    %v2090 = vunpack.c.l.b16 %v1958
    %v2091 = vunpack.c.l.b16 %v1959
    %v2092 = vpack.c.b16 %v2029, %v2028
    %v2093 = vpack.c.b16 %v2031, %v2030
    %v2094 = vpack.c.b16 %v2033, %v2032
    %v2095 = vpack.c.b16 %v2035, %v2034
    %v2096 = vpack.c.b16 %v2037, %v2036
    %v2097 = vpack.c.b16 %v2039, %v2038
    %v2098 = vpack.c.b16 %v2041, %v2040
    %v2099 = vpack.c.b16 %v2043, %v2042
    %v2100 = vpack.c.b16 %v2045, %v2044
    %v2101 = vpack.c.b16 %v2047, %v2046
    %v2102 = vpack.c.b16 %v2049, %v2048
    %v2103 = vpack.c.b16 %v2051, %v2050
    %v2104 = vpack.c.b16 %v2053, %v2052
    %v2105 = vpack.c.b16 %v2055, %v2054
    %v2106 = vpack.c.b16 %v2057, %v2056
    %v2107 = vpack.c.b16 %v2059, %v2058
    %v2108 = vpack.c.b16 %v2061, %v2060
    %v2109 = vpack.c.b16 %v2063, %v2062
    %v2110 = vpack.c.b16 %v2065, %v2064
    %v2111 = vpack.c.b16 %v2067, %v2066
    %v2112 = vpack.c.b16 %v2069, %v2068
    %v2113 = vpack.c.b16 %v2071, %v2070
    %v2114 = vpack.c.b16 %v2073, %v2072
    %v2115 = vpack.c.b16 %v2075, %v2074
    %v2116 = vpack.c.b16 %v2077, %v2076
    %v2117 = vpack.c.b16 %v2079, %v2078
    %v2118 = vpack.c.b16 %v2081, %v2080
    %v2119 = vpack.c.b16 %v2083, %v2082
    %v2120 = vpack.c.b16 %v2085, %v2084
    %v2121 = vpack.c.b16 %v2087, %v2086
    %v2122 = vpack.c.b16 %v2089, %v2088
    %v2123 = vpack.c.b16 %v2091, %v2090
    %2156 = vmatpush.bf16.msra.mxu0 %v2099
    %2157 = vmatpush.bf16.msra.mxu0 %v2098
    %2158 = vmatpush.bf16.msra.mxu0 %v2097
    %2159 = vmatpush.bf16.msra.mxu0 %v2096
    %2160 = vmatpush.bf16.msra.mxu0 %v2095
    %2161 = vmatpush.bf16.msra.mxu0 %v2094
    %2162 = vmatpush.bf16.msra.mxu0 %v2093
    %2163 = vmatpush.bf16.msra.mxu0 %v2092
    %2164 = vmatmul.bf16.gmra.mxu0 %v1892
    %v2165 = vpop.f32.mrf.mxu0
    %v2166 = vadd.f32 %v1962, %v2165
    %v2167 = vpop.f32.mrf.mxu0
    %2168 = vdwg.mxu0
    %2169 = vmatpush.bf16.msra.mxu0 %v2107
    %2170 = vmatpush.bf16.msra.mxu0 %v2106
    %2171 = vmatpush.bf16.msra.mxu0 %v2105
    %2172 = vmatpush.bf16.msra.mxu0 %v2104
    %2173 = vmatpush.bf16.msra.mxu0 %v2103
    %2174 = vmatpush.bf16.msra.mxu0 %v2102
    %2175 = vmatpush.bf16.msra.mxu0 %v2101
    %2176 = vmatpush.bf16.msra.mxu0 %v2100
    %2177 = vmatmul.bf16.gmra.mxu0 %v1893
    %v2178 = vpop.f32.mrf.mxu0
    %v2179 = vadd.f32 %v2166, %v2178
    %v2180 = vpop.f32.mrf.mxu0
    %2181 = vdwg.mxu0
    %2182 = vmatpush.bf16.msra.mxu0 %v2115
    %2183 = vmatpush.bf16.msra.mxu0 %v2114
    %2184 = vmatpush.bf16.msra.mxu0 %v2113
    %2185 = vmatpush.bf16.msra.mxu0 %v2112
    %2186 = vmatpush.bf16.msra.mxu0 %v2111
    %2187 = vmatpush.bf16.msra.mxu0 %v2110
    %2188 = vmatpush.bf16.msra.mxu0 %v2109
    %2189 = vmatpush.bf16.msra.mxu0 %v2108
    %2190 = vmatmul.bf16.gmra.mxu0 %v1894
    %v2191 = vpop.f32.mrf.mxu0
    %v2192 = vadd.f32 %v2179, %v2191
    %v2193 = vpop.f32.mrf.mxu0
    %2194 = vdwg.mxu0
    %2195 = vmatpush.bf16.msra.mxu0 %v2123
    %2196 = vmatpush.bf16.msra.mxu0 %v2122
    %2197 = vmatpush.bf16.msra.mxu0 %v2121
    %2198 = vmatpush.bf16.msra.mxu0 %v2120
    %2199 = vmatpush.bf16.msra.mxu0 %v2119
    %2200 = vmatpush.bf16.msra.mxu0 %v2118
    %2201 = vmatpush.bf16.msra.mxu0 %v2117
    %2202 = vmatpush.bf16.msra.mxu0 %v2116
    %2203 = vmatmul.bf16.gmra.mxu0 %v1895
    %v2204 = vpop.f32.mrf.mxu0
    %v2205 = vadd.f32 %v2192, %v2204
    %v2206 = vpop.f32.mrf.mxu0
    %2207 = vdwg.mxu0
    %v2208 = vmax.f32 %v2205, 0.0
    %v2209 = vpack.c.bf16 %v2208, %v2208
    %v2210 = vld [vmem:[%s11] sm:$0xf]
    %v2211 = vld [vmem:[%s11 + $0x4] sm:$0xf]
    %v2212 = vld [vmem:[%s11 + $0x8] sm:$0xf]
    %v2213 = vld [vmem:[%s11 + $0xc] sm:$0xf]
    %v2214 = vld [vmem:[%s11 + $0x10] sm:$0xf]
    %v2215 = vld [vmem:[%s11 + $0x14] sm:$0xf]
    %v2216 = vld [vmem:[%s11 + $0x18] sm:$0xf]
    %v2217 = vld [vmem:[%s11 + $0x1c] sm:$0xf]
    %v2218 = vld [vmem:[%s11 + $0x20] sm:$0xf]
    %v2219 = vld [vmem:[%s11 + $0x24] sm:$0xf]
    %v2220 = vld [vmem:[%s11 + $0x28] sm:$0xf]
    %v2221 = vld [vmem:[%s11 + $0x2c] sm:$0xf]
    %v2222 = vld [vmem:[%s11 + $0x30] sm:$0xf]
    %v2223 = vld [vmem:[%s11 + $0x34] sm:$0xf]
    %v2224 = vld [vmem:[%s11 + $0x38] sm:$0xf]
    %v2225 = vld [vmem:[%s11 + $0x3c] sm:$0xf]
    %v2226 = vld [vmem:[%s12] sm:$0x1]
    %v2228 = vperm.slane %v2226, 0
    %v2246 = vunpack.c.l.b16 %v2210
    %v2247 = vunpack.c.l.b16 %v2211
    %v2248 = vunpack.c.l.b16 %v2212
    %v2249 = vunpack.c.l.b16 %v2213
    %v2250 = vunpack.c.l.b16 %v2214
    %v2251 = vunpack.c.l.b16 %v2215
    %v2252 = vunpack.c.l.b16 %v2216
    %v2253 = vunpack.c.l.b16 %v2217
    %v2254 = vunpack.c.l.b16 %v2218
    %v2255 = vunpack.c.l.b16 %v2219
    %v2256 = vunpack.c.l.b16 %v2220
    %v2257 = vunpack.c.l.b16 %v2221
    %v2258 = vunpack.c.l.b16 %v2222
    %v2259 = vunpack.c.l.b16 %v2223
    %v2260 = vunpack.c.l.b16 %v2224
    %v2261 = vunpack.c.l.b16 %v2225
    %v2262 = vpack.c.b16 %v2247, %v2246
    %v2263 = vpack.c.b16 %v2249, %v2248
    %v2264 = vpack.c.b16 %v2251, %v2250
    %v2265 = vpack.c.b16 %v2253, %v2252
    %v2266 = vpack.c.b16 %v2255, %v2254
    %v2267 = vpack.c.b16 %v2257, %v2256
    %v2268 = vpack.c.b16 %v2259, %v2258
    %v2269 = vpack.c.b16 %v2261, %v2260
    %2278 = vmatpush.bf16.msra.mxu0 %v2269
    %2279 = vmatpush.bf16.msra.mxu0 %v2268
    %2280 = vmatpush.bf16.msra.mxu0 %v2267
    %2281 = vmatpush.bf16.msra.mxu0 %v2266
    %2282 = vmatpush.bf16.msra.mxu0 %v2265
    %2283 = vmatpush.bf16.msra.mxu0 %v2264
    %2284 = vmatpush.bf16.msra.mxu0 %v2263
    %2285 = vmatpush.bf16.msra.mxu0 %v2262
    %2286 = vmatmul.bf16.gmra.mxu0 %v2209
    %v2287 = vpop.f32.mrf.mxu0
    %v2288 = vadd.f32 %v2228, %v2287
    %v2289 = vpop.f32.mrf.mxu0
    %2290 = vdwg.mxu0
    %2291 = vmax.xlane.f32.xlu0 %v2288
    %v2292 = vpop.xlane.xlu0 %2291
    %v2293 = vsub.f32 %v2288, %v2292
    %v2294 = vmul.f32 %v2293, 1.442695
    %v2295 = vpow.pop %v2294
    %2296 = vadd.xlane.f32.xlu0 %v2295
    %v2297 = vpop.xlane.xlu0 %2296
    %v2298 = vrcp.pop %v2297
    %v2299 = vmul.f32 %v2297, %v2298
    %v2300 = vsub.f32 1.0, %v2299
    %v2301 = vmul.f32 %v2298, %v2300
    %v2302 = vadd.f32 %v2298, %v2301
    %vm2303 = vweird.f32 %v2297
    %vm2304 = vweird.f32 %v2298
    %vm2305 = vmor %vm2303, %vm2304
    %v2306 = vsel %vm2305, %v2298, %v2302
    %v2307 = vand.u32 2147483647, %v2297
    %vm2308 = vcmp.eq.f32.partialorder %v2307, 8.507059e+37
    %v2309 = vand.u32 %v2297, 2147483648
    %v2310 = vor.u32 1.1754944e-38, %v2309
    %v2311 = vsel %vm2308, %v2310, %v2306
    %v2312 = vmul.f32 %v2295, %v2311
    %2313 = vst [vmem:[#allocation5] sm:$0xff] %v2312
    // Predicated region
    $region54: #{tpu_custom_call.1} parent=1 // pred_check
      _
    $region55: #{tpu_custom_call.1} parent=1 // pred_check_branch
      %2315 = sbr.rel (0) target = $region57
    $region56: #{tpu_custom_call.1} parent=1 // pred_region
      %2317 = vsyncadd [#allocation6], 0
      %s2319 = sshll.u32 [#allocation5], 4
      %s2320 = int_to_ptr.vmem [resolvable:$true] %s2319
      %s2321 = sshll.u32 %s13, 4
      %s2322 = int_to_ptr.hbm [resolvable:$true] %s2321
      %2324 = dma.vmem_to_hbm [thread:$0]  %s2320, 128, %s2322, [#allocation6]
    $region57: #{tpu_custom_call.1} parent=1 // pred_fallthru
      _
    // Predicated region
    $region58: #{tpu_custom_call.1} parent=1 // pred_check
      _
    $region59: #{tpu_custom_call.1} parent=1 // pred_check_branch
      %2326 = sbr.rel (0) target = $region61
    $region60: #{tpu_custom_call.1} parent=1 // pred_region
      %2328 = dma.done [#allocation6], 128
    $region61: #{tpu_custom_call.1} parent=1 // pred_fallthru
      _
    %2329 = vsyncpa [#allocation6], 1

</llo_original>
